<compile_context>
chip_gen: v7x
topology: tpu7x:2x2x1
jax: 0.10.0
libtpu: 0.0.40
codegen_flags: <defaults>
</compile_context>

<pallas_src>
import functools

import jax
import jax.numpy as jnp
from jax.experimental import pallas as pl
from jax.experimental.pallas import tpu as pltpu

NEG_SLOPE = 0.2          # DGL GATConv default negative_slope
SEM_HIDDEN = 128         # SemanticAttention hidden_size default


def _round_up(x, m):
    return (x + m - 1) // m * m


# ----------------------------------------------------------------------------
# Fused HAN-layer kernel: grid = (num_metapaths,)
# ----------------------------------------------------------------------------
def _han_layer_kernel(adj_ref, wfull_ref, b_ref, h_ref, w1_ref, b1_ref, w2t_ref,
                      *rest, num_meta, num_heads, out_feats, fuse_predict):
    if fuse_predict:
        wp_ref, bp_ref, o_ref, full_scr, z_scr = rest
    else:
        o_ref, full_scr, z_scr = rest

    m = pl.program_id(0)
    N = h_ref.shape[0]
    H, O = num_heads, out_feats
    D = H * O
    WP = full_scr.shape[2]          # 128-padded per-metapath fc output width

    # ---- batched fc for ALL metapaths: one lane-dense MXU matmul at m == 0 ----
    @pl.when(m == 0)
    def _():
        full_all = jnp.dot(h_ref[...], wfull_ref[...],
                           preferred_element_type=jnp.float32)        # (N, M*WP)
        for mm in range(num_meta):                                    # vreg-boundary slices
            full_scr[mm] = full_all[:, mm * WP:(mm + 1) * WP]

    # ---------------- GATConv for metapath m --------------------------------
    full = full_scr[m]                                                # (N, WP)
    feat = full[:, :D]                                                # (N, H*O)
    el = full[:, D:D + H]                                             # (N, H) source logits
    er = full[:, D + H:D + 2 * H]                                     # (N, H) dst logits
    elT = jnp.transpose(el)                                           # (H, N)

    edge = adj_ref[0].astype(jnp.float32) > 0                         # int8 adjacency mask
    bias = b_ref[m]                                                   # (1, D)
    feat_bf = feat.astype(jnp.bfloat16)                               # hoisted out of head loop

    parts = []
    for hd in range(H):                                               # static, small head count
        e = er[:, hd:hd + 1] + elT[hd:hd + 1, :]                      # (N, N): er[dst] + el[src]
        e = jnp.where(e > 0, e, NEG_SLOPE * e)                        # leaky_relu
        e = jnp.where(edge, e, jnp.float32(-1e9))                     # mask non-edges
        e = e - jnp.max(e, axis=1, keepdims=True)
        p = jnp.where(edge, jnp.exp(e), jnp.float32(0.0))
        # EUP reciprocal instead of a VALU divide (edge softmax over sources).
        alpha = p * pl.reciprocal(jnp.sum(p, axis=1, keepdims=True), approx=True)
        # Aggregation matmul in bf16 with f32 accumulation.
        agg = jnp.dot(alpha.astype(jnp.bfloat16), feat_bf[:, hd * O:(hd + 1) * O],
                      preferred_element_type=jnp.float32)             # (N, O)
        rst = agg + bias[:, hd * O:(hd + 1) * O]
        parts.append(jnp.where(rst > 0, rst, jnp.exp(rst) - 1.0))     # ELU
    z_m = parts[0] if H == 1 else jnp.concatenate(parts, axis=1)      # (N, D)
    z_scr[m] = z_m.astype(z_scr.dtype)                                # single full-width store

    # --------- Semantic attention + output (last metapath only) -------------
    @pl.when(m == num_meta - 1)
    def _():
        z_all = z_scr[...]                                            # (M, N, D) bf16
        z_flat = z_all.reshape(num_meta * N, D)                       # leading-dim reshape (no copy)
        # bf16-in / f32-acc projection for the semantic attention MLP.
        t = jnp.tanh(jnp.dot(z_flat, w1_ref[...],
                             preferred_element_type=jnp.float32) + b1_ref[...])  # (M*N, S)
        scores = []
        for mm in range(num_meta):
            tbar = jnp.mean(t[mm * N:(mm + 1) * N], axis=0, keepdims=True)       # (1, S)
            # w2 dot done on the VPU (avoids a lane-width-1 MXU matmul).
            scores.append(jnp.sum(tbar * w2t_ref[...], axis=1, keepdims=True))   # (1, 1)
        w = scores[0] if num_meta == 1 else jnp.concatenate(scores, axis=1)      # (1, M)
        beta = jax.nn.softmax(w, axis=1)                                         # (1, M)

        out = beta[:, 0:1] * z_all[0].astype(jnp.float32)
        for mm in range(1, num_meta):
            out = out + beta[:, mm:mm + 1] * z_all[mm].astype(jnp.float32)       # (N, D)

        if fuse_predict:
            # Fused predict Linear (bf16 MXU, f32 acc), lane-padded to 128 cols.
            o_ref[...] = (jnp.dot(out.astype(jnp.bfloat16), wp_ref[...],
                                  preferred_element_type=jnp.float32) + bp_ref[...])
        else:
            # Hidden layer: single lane-dense bf16 store with in-register zero pad
            # (no identity-projection matmul).
            outw = o_ref.shape[1]
            if outw > D:
                out = jnp.concatenate(
                    [out, jnp.zeros((N, outw - D), out.dtype)], axis=1)
            o_ref[...] = out.astype(o_ref.dtype)


def han_layer(adj_i8, h, lp, *, num_heads, out_feats, fuse_predict):
    """One fused HAN layer: all metapath GATConvs + semantic attention (+ predict)."""
    M, N, _ = adj_i8.shape
    D = num_heads * out_feats
    WP = _round_up(D + 2 * num_heads, 128)
    Fp = h.shape[1]
    S = lp["w1"].shape[1]
    if fuse_predict:
        OUTW = lp["wp"].shape[1]
        out_dtype = jnp.float32
    else:
        OUTW = _round_up(D, 128)
        out_dtype = jnp.bfloat16

    in_specs = [
        pl.BlockSpec((1, N, N), lambda m: (m, 0, 0)),        # adj[m] (int8, double-buffered)
        pl.BlockSpec((Fp, M * WP), lambda m: (0, 0)),        # batched fused fc weights (resident)
        pl.BlockSpec((M, 1, D), lambda m: (0, 0, 0)),        # GAT biases (resident)
        pl.BlockSpec((N, Fp), lambda m: (0, 0)),             # node features, bf16 (resident)
        pl.BlockSpec((D, S), lambda m: (0, 0)),              # semantic W1 (bf16)
        pl.BlockSpec((1, S), lambda m: (0, 0)),              # semantic b1
        pl.BlockSpec((1, S), lambda m: (0, 0)),              # semantic w2^T
    ]
    args = [adj_i8, lp["wfull"], lp["bias"], h, lp["w1"], lp["b1"], lp["w2t"]]
    if fuse_predict:
        in_specs += [pl.BlockSpec((D, OUTW), lambda m: (0, 0)),   # predict weight (bf16)
                     pl.BlockSpec((1, OUTW), lambda m: (0, 0))]   # predict bias
        args += [lp["wp"], lp["bp"]]

    kern = functools.partial(_han_layer_kernel, num_meta=M, num_heads=num_heads,
                             out_feats=out_feats, fuse_predict=fuse_predict)
    return pl.pallas_call(
        kern,
        out_shape=jax.ShapeDtypeStruct((N, OUTW), out_dtype),
        grid_spec=pltpu.PrefetchScalarGridSpec(
            num_scalar_prefetch=0,
            grid=(M,),
            in_specs=in_specs,
            out_specs=pl.BlockSpec((N, OUTW), lambda m: (0, 0)),
            scratch_shapes=[
                pltpu.VMEM((M, N, WP), jnp.float32),    # per-metapath [feat|el|er] (batched fc)
                pltpu.VMEM((M, N, D), jnp.bfloat16),    # per-metapath GAT embeddings z
            ],
        ),
        compiler_params=pltpu.CompilerParams(
            # metapath axis carries scratch/output state -> must stay "arbitrary"
            dimension_semantics=("arbitrary",),
            vmem_limit_bytes=32 * 1024 * 1024,
        ),
    )(*args)


# ----------------------------------------------------------------------------
# Parameters & host-side weight preparation
# ----------------------------------------------------------------------------
def init_params(key, num_meta, in_size, hidden, out_size, heads):
    params = {"layers": []}
    dim_in = in_size
    for nh in heads:
        layer = {"gat": []}
        for _ in range(num_meta):
            key, k1, k2, k3, k4 = jax.random.split(key, 5)
            layer["gat"].append({
                "W":  0.1 * jax.random.normal(k1, (dim_in, nh * hidden), jnp.float32),
                "al": 0.1 * jax.random.normal(k2, (nh, hidden), jnp.float32),
                "ar": 0.1 * jax.random.normal(k3, (nh, hidden), jnp.float32),
                "b":  0.1 * jax.random.normal(k4, (1, nh * hidden), jnp.float32),
            })
        D = nh * hidden
        key, k1, k2, k3 = jax.random.split(key, 4)
        layer["sem"] = {
            "W1": 0.1 * jax.random.normal(k1, (D, SEM_HIDDEN), jnp.float32),
            "b1": 0.1 * jax.random.normal(k2, (1, SEM_HIDDEN), jnp.float32),
            "w2": 0.1 * jax.random.normal(k3, (SEM_HIDDEN, 1), jnp.float32),
        }
        params["layers"].append(layer)
        dim_in = D
    key, k1, k2 = jax.random.split(key, 3)
    params["predict"] = {
        "W": 0.1 * jax.random.normal(k1, (dim_in, out_size), jnp.float32),
        "b": 0.1 * jax.random.normal(k2, (1, out_size), jnp.float32),
    }
    return params


def prepare_pallas_params(params, heads, hidden):
    """Fold attn_l/attn_r into the fc weight, stack all metapaths lane-wise (128-padded
    per metapath), pre-cast matmul weights to bf16, and fuse predict into the last layer."""
    layers = []
    n_layers = len(heads)
    for li, (layer, nh) in enumerate(zip(params["layers"], heads)):
        D = nh * hidden
        w_raw = D + 2 * nh
        WP = _round_up(w_raw, 128)
        wcols, b_list = [], []
        for gp in layer["gat"]:
            W, al, ar, b = gp["W"], gp["al"], gp["ar"], gp["b"]
            Fin = W.shape[0]
            Wr = W.reshape(Fin, nh, hidden)
            W_el = jnp.einsum("fho,ho->fh", Wr, al)      # fold attn_l into fc
            W_er = jnp.einsum("fho,ho->fh", Wr, ar)      # fold attn_r into fc
            wf = jnp.concatenate([W, W_el, W_er], axis=1)              # (Fin, D+2H)
            Fp = _round_up(Fin, 128)
            wf = jnp.pad(wf, ((0, Fp - Fin), (0, WP - w_raw)))         # K->128, lanes->128
            wcols.append(wf)
            b_list.append(b.reshape(1, D))
        entry = {
            "wfull": jnp.concatenate(wcols, axis=1).astype(jnp.bfloat16),  # (Fp, M*WP)
            "bias": jnp.stack(b_list, axis=0),                             # (M, 1, D)
            "w1": layer["sem"]["W1"].astype(jnp.bfloat16),                 # (D, 128)
            "b1": layer["sem"]["b1"],                                      # (1, 128)
            "w2t": jnp.transpose(layer["sem"]["w2"]),                      # (1, 128)
        }
        if li == n_layers - 1:
            Wp, bp = params["predict"]["W"], params["predict"]["b"]
            OUTW = _round_up(Wp.shape[1], 128)
            entry["wp"] = jnp.pad(Wp, ((0, 0), (0, OUTW - Wp.shape[1]))).astype(jnp.bfloat16)
            entry["bp"] = jnp.pad(bp, ((0, 0), (0, OUTW - bp.shape[1])))
        layers.append(entry)
    return layers


def han_forward(params, adjs, h, hidden, heads, out_size):
    """Pallas forward pass: one fused pallas_call per HAN layer."""
    adj_i8 = jnp.stack(adjs, axis=0).astype(jnp.int8)          # mask-only -> int8 DMA
    layers = prepare_pallas_params(params, heads, hidden)
    Fp = _round_up(h.shape[1], 128)
    x = jnp.pad(h, ((0, 0), (0, Fp - h.shape[1]))).astype(jnp.bfloat16)
    n_layers = len(heads)
    for li, (lp, nh) in enumerate(zip(layers, heads)):
        x = han_layer(adj_i8, x, lp, num_heads=nh, out_feats=hidden,
                      fuse_predict=(li == n_layers - 1))
    return x[:, :out_size]


# ----------------------------------------------------------------------------
# Pure-JAX f32 reference (same math, no Pallas) for correctness check
# ----------------------------------------------------------------------------
def _gat_ref(adj, h, W, al, ar, b, num_heads, out_feats):
    feat = h @ W
    fr = feat.reshape(-1, num_heads, out_feats)
    el = jnp.einsum("nho,ho->nh", fr, al)
    er = jnp.einsum("nho,ho->nh", fr, ar)
    outs = []
    for hd in range(num_heads):
        e = er[:, hd:hd + 1] + el[:, hd][None, :]
        e = jnp.where(e > 0, e, NEG_SLOPE * e)
        e = jnp.where(adj > 0, e, -1e9)
        p = jnp.where(adj > 0, jnp.exp(e - jnp.max(e, axis=1, keepdims=True)), 0.0)
        alpha = p / jnp.sum(p, axis=1, keepdims=True)
        outs.append(alpha @ feat[:, hd * out_feats:(hd + 1) * out_feats])
    out = jnp.concatenate(outs, axis=1) + b
    return jnp.where(out > 0, out, jnp.exp(out) - 1.0)       # ELU


def _sem_ref(z, W1, b1, w2):
    proj = jnp.tanh(z @ W1 + b1) @ w2             # (M, N, 1)
    w = jnp.mean(proj, axis=1)                    # (M, 1)
    beta = jax.nn.softmax(w, axis=0)              # (M, 1)
    return jnp.sum(beta[:, None, :] * z, axis=0)  # (N, D)


def han_ref(params, adjs, h, hidden, heads):
    for layer, nh in zip(params["layers"], heads):
        embeds = [_gat_ref(adj, h, gp["W"], gp["al"], gp["ar"], gp["b"], nh, hidden)
                  for adj, gp in zip(adjs, layer["gat"])]
        z = jnp.stack(embeds, axis=0)
        sp = layer["sem"]
        h = _sem_ref(z, sp["W1"], sp["b1"], sp["w2"])
    return h @ params["predict"]["W"] + params["predict"]["b"]


# ----------------------------------------------------------------------------
if __name__ == "__main__":
    N, M = 64, 2                      # nodes, metapaths
    in_size, hidden, out_size = 32, 8, 3
    heads = [2, 2]

    key = jax.random.PRNGKey(0)
    key, kf = jax.random.split(key)
    h0 = jax.random.normal(kf, (N, in_size), jnp.float32)

    adjs = []
    for _ in range(M):
        key, ka = jax.random.split(key)
        a = (jax.random.uniform(ka, (N, N)) < 0.1).astype(jnp.float32)
        a = jnp.maximum(a, jnp.eye(N, dtype=jnp.float32))   # self loops: every dst has in-degree >= 1
        adjs.append(a)

    key, kp = jax.random.split(key)
    params = init_params(kp, M, in_size, hidden, out_size, heads)

    out = han_forward(params, adjs, h0, hidden, heads, out_size)
    out = jax.block_until_ready(out)

    ref = han_ref(params, adjs, h0, hidden, heads)
    assert out.shape == (N, out_size)
    # Looser tolerance: kernel runs bf16 matmul inputs / bf16 inter-layer activations /
    # bf16 z scratch (all with f32 accumulation) and the EUP approximate reciprocal,
    # while the reference is full f32.
    assert jnp.allclose(out, ref, atol=3e-2, rtol=3e-2), \
        f"mismatch vs JAX reference: max abs err {jnp.max(jnp.abs(out - ref))}"

    print("KERNEL_OK")
</pallas_src>

<mosaic_0001>
module attributes {stable_mosaic.version = 11 : i64} {
  func.func @_han_layer_kernel(%arg0: i32, %arg1: memref<1x64x64xi8, #tpu.memory_space<vmem>>, %arg2: memref<128x256xbf16, #tpu.memory_space<vmem>>, %arg3: memref<2x1x16xf32, #tpu.memory_space<vmem>>, %arg4: memref<64x128xbf16, #tpu.memory_space<vmem>>, %arg5: memref<16x128xbf16, #tpu.memory_space<vmem>>, %arg6: memref<1x128xf32, #tpu.memory_space<vmem>>, %arg7: memref<1x128xf32, #tpu.memory_space<vmem>>, %arg8: memref<64x128xbf16, #tpu.memory_space<vmem>>, %arg9: memref<2x64x128xf32, #tpu.memory_space<vmem>>, %arg10: memref<2x64x16xbf16, #tpu.memory_space<vmem>>) attributes {dimension_semantics = [#tpu.dimension_semantics<arbitrary>], iteration_bounds = array<i64: 2>, scalar_prefetch = 0 : i64, scratch_operands = 2 : i64, tpu.core_type = #tpu.core_type<tc>, window_params = [{transform_indices = @transform_0, window_bounds = array<i64: 1, 64, 64>}, {pipeline_mode = #tpu.pipeline_mode<synchronous>, transform_indices = @transform_1, window_bounds = array<i64: 128, 256>}, {pipeline_mode = #tpu.pipeline_mode<synchronous>, transform_indices = @transform_2, window_bounds = array<i64: 2, 1, 16>}, {pipeline_mode = #tpu.pipeline_mode<synchronous>, transform_indices = @transform_3, window_bounds = array<i64: 64, 128>}, {pipeline_mode = #tpu.pipeline_mode<synchronous>, transform_indices = @transform_4, window_bounds = array<i64: 16, 128>}, {pipeline_mode = #tpu.pipeline_mode<synchronous>, transform_indices = @transform_5, window_bounds = array<i64: 1, 128>}, {pipeline_mode = #tpu.pipeline_mode<synchronous>, transform_indices = @transform_6, window_bounds = array<i64: 1, 128>}, {pipeline_mode = #tpu.pipeline_mode<synchronous>, transform_indices = @transform_7, window_bounds = array<i64: 64, 128>}]} {
    %c0_i32 = arith.constant 0 : i32
    %0 = arith.cmpi eq, %arg0, %c0_i32 : i32
    %1 = arith.extui %0 : i1 to i32
    %c0_i32_0 = arith.constant 0 : i32
    %2 = arith.cmpi ne, %1, %c0_i32_0 : i32
    scf.if %2 {
      %c0_28 = arith.constant 0 : index
      %c0_29 = arith.constant 0 : index
      %100 = vector.load %arg4[%c0_28, %c0_29] : memref<64x128xbf16, #tpu.memory_space<vmem>>, vector<64x128xbf16>
      %c0_30 = arith.constant 0 : index
      %c0_31 = arith.constant 0 : index
      %101 = vector.load %arg2[%c0_30, %c0_31] : memref<128x256xbf16, #tpu.memory_space<vmem>>, vector<128x256xbf16>
      %cst_32 = arith.constant dense<0.000000e+00> : vector<64x256xf32>
      %102 = tpu.matmul %100, %101, %cst_32 {dimension_numbers = #tpu.dot_dimension_numbers<[1], [0], [0], [1], [0, 0, 1, 1], [], []>} : vector<64x128xbf16>, vector<128x256xbf16>, vector<64x256xf32> -> vector<64x256xf32>
      %103 = vector.extract_strided_slice %102 {offsets = [0, 0], sizes = [64, 128], strides = [1, 1]} : vector<64x256xf32> to vector<64x128xf32>
      %c0_33 = arith.constant 0 : index
      %c0_34 = arith.constant 0 : index
      %c0_35 = arith.constant 0 : index
      %104 = vector.load %arg9[%c0_33, %c0_34, %c0_35] : memref<2x64x128xf32, #tpu.memory_space<vmem>>, vector<1x64x128xf32>
      %105 = vector.shape_cast %104 : vector<1x64x128xf32> to vector<64x128xf32>
      %106 = vector.shape_cast %103 : vector<64x128xf32> to vector<1x64x128xf32>
      tpu.vector_store %arg9[%c0_33, %c0_34, %c0_35], %106 {strides = array<i32>} : memref<2x64x128xf32, #tpu.memory_space<vmem>>, vector<1x64x128xf32>,
      %107 = vector.extract_strided_slice %102 {offsets = [0, 128], sizes = [64, 128], strides = [1, 1]} : vector<64x256xf32> to vector<64x128xf32>
      %c1 = arith.constant 1 : index
      %c0_36 = arith.constant 0 : index
      %c0_37 = arith.constant 0 : index
      %108 = vector.load %arg9[%c1, %c0_36, %c0_37] : memref<2x64x128xf32, #tpu.memory_space<vmem>>, vector<1x64x128xf32>
      %109 = vector.shape_cast %108 : vector<1x64x128xf32> to vector<64x128xf32>
      %110 = vector.shape_cast %107 : vector<64x128xf32> to vector<1x64x128xf32>
      tpu.vector_store %arg9[%c1, %c0_36, %c0_37], %110 {strides = array<i32>} : memref<2x64x128xf32, #tpu.memory_space<vmem>>, vector<1x64x128xf32>,
    } else {
    }
    %3 = arith.index_cast %arg0 : i32 to index
    %c0 = arith.constant 0 : index
    %c0_1 = arith.constant 0 : index
    %4 = vector.load %arg9[%3, %c0, %c0_1] : memref<2x64x128xf32, #tpu.memory_space<vmem>>, vector<1x64x128xf32>
    %5 = vector.shape_cast %4 : vector<1x64x128xf32> to vector<64x128xf32>
    %6 = vector.extract_strided_slice %5 {offsets = [0, 0], sizes = [64, 16], strides = [1, 1]} : vector<64x128xf32> to vector<64x16xf32>
    %7 = vector.extract_strided_slice %5 {offsets = [0, 16], sizes = [64, 2], strides = [1, 1]} : vector<64x128xf32> to vector<64x2xf32>
    %8 = vector.extract_strided_slice %5 {offsets = [0, 18], sizes = [64, 2], strides = [1, 1]} : vector<64x128xf32> to vector<64x2xf32>
    %9 = tpu.transpose %7, [1, 0] : vector<64x2xf32> -> vector<2x64xf32>
    %c0_2 = arith.constant 0 : index
    %c0_3 = arith.constant 0 : index
    %c0_4 = arith.constant 0 : index
    %10 = vector.load %arg1[%c0_2, %c0_3, %c0_4] : memref<1x64x64xi8, #tpu.memory_space<vmem>>, vector<1x64x64xi8>
    %11 = vector.shape_cast %10 : vector<1x64x64xi8> to vector<64x64xi8>
    %12 = arith.sitofp %11 : vector<64x64xi8> to vector<64x64xf32>
    %cst = arith.constant 0.000000e+00 : f32
    %13 = vector.broadcast %cst : f32 to vector<64x64xf32>
    %14 = arith.cmpf ogt, %12, %13 : vector<64x64xf32>
    %15 = arith.index_cast %arg0 : i32 to index
    %c0_5 = arith.constant 0 : index
    %c0_6 = arith.constant 0 : index
    %16 = vector.load %arg3[%15, %c0_5, %c0_6] : memref<2x1x16xf32, #tpu.memory_space<vmem>>, vector<1x1x16xf32>
    %17 = vector.shape_cast %16 : vector<1x1x16xf32> to vector<1x16xf32>
    %18 = arith.truncf %6 : vector<64x16xf32> to vector<64x16xbf16>
    %19 = vector.extract_strided_slice %8 {offsets = [0, 0], sizes = [64, 1], strides = [1, 1]} : vector<64x2xf32> to vector<64x1xf32>
    %20 = vector.extract_strided_slice %9 {offsets = [0, 0], sizes = [1, 64], strides = [1, 1]} : vector<2x64xf32> to vector<1x64xf32>
    %21 = vector.broadcast %19 : vector<64x1xf32> to vector<64x64xf32>
    %22 = vector.broadcast %20 : vector<1x64xf32> to vector<64x64xf32>
    %23 = arith.addf %21, %22 : vector<64x64xf32>
    %cst_7 = arith.constant 0.000000e+00 : f32
    %24 = vector.broadcast %cst_7 : f32 to vector<64x64xf32>
    %25 = arith.cmpf ogt, %23, %24 : vector<64x64xf32>
    %cst_8 = arith.constant 2.000000e-01 : f32
    %26 = vector.broadcast %cst_8 : f32 to vector<64x64xf32>
    %27 = arith.mulf %26, %23 : vector<64x64xf32>
    %28 = arith.select %25, %23, %27 : vector<64x64xi1>, vector<64x64xf32>
    %cst_9 = arith.constant -1.000000e+09 : f32
    %29 = vector.broadcast %cst_9 : f32 to vector<64x64xf32>
    %30 = arith.select %14, %28, %29 : vector<64x64xi1>, vector<64x64xf32>
    %cst_10 = arith.constant dense<0xFF800000> : vector<64xf32>
    %31 = vector.multi_reduction <maximumf>, %30, %cst_10 [1] : vector<64x64xf32> to vector<64xf32>
    %32 = vector.shape_cast %31 : vector<64xf32> to vector<64x1xf32>
    %33 = vector.broadcast %32 : vector<64x1xf32> to vector<64x64xf32>
    %34 = arith.subf %30, %33 : vector<64x64xf32>
    %35 = math.exp %34 : vector<64x64xf32>
    %cst_11 = arith.constant 0.000000e+00 : f32
    %36 = vector.broadcast %cst_11 : f32 to vector<64x64xf32>
    %37 = arith.select %14, %35, %36 : vector<64x64xi1>, vector<64x64xf32>
    %cst_12 = arith.constant dense<0.000000e+00> : vector<64xf32>
    %38 = vector.multi_reduction <add>, %37, %cst_12 [1] : vector<64x64xf32> to vector<64xf32>
    %39 = vector.shape_cast %38 : vector<64xf32> to vector<64x1xf32>
    %40 = tpu.reciprocal %39 {approx = true} : vector<64x1xf32> -> vector<64x1xf32>
    %41 = vector.broadcast %40 : vector<64x1xf32> to vector<64x64xf32>
    %42 = arith.mulf %37, %41 : vector<64x64xf32>
    %43 = arith.truncf %42 : vector<64x64xf32> to vector<64x64xbf16>
    %44 = vector.extract_strided_slice %18 {offsets = [0, 0], sizes = [64, 8], strides = [1, 1]} : vector<64x16xbf16> to vector<64x8xbf16>
    %cst_13 = arith.constant dense<0.000000e+00> : vector<64x8xf32>
    %45 = tpu.matmul %43, %44, %cst_13 {dimension_numbers = #tpu.dot_dimension_numbers<[1], [0], [0], [1], [0, 0, 1, 1], [], []>} : vector<64x64xbf16>, vector<64x8xbf16>, vector<64x8xf32> -> vector<64x8xf32>
    %46 = vector.extract_strided_slice %17 {offsets = [0, 0], sizes = [1, 8], strides = [1, 1]} : vector<1x16xf32> to vector<1x8xf32>
    %47 = vector.broadcast %46 : vector<1x8xf32> to vector<64x8xf32>
    %48 = arith.addf %45, %47 : vector<64x8xf32>
    %cst_14 = arith.constant 0.000000e+00 : f32
    %49 = vector.broadcast %cst_14 : f32 to vector<64x8xf32>
    %50 = arith.cmpf ogt, %48, %49 : vector<64x8xf32>
    %51 = math.exp %48 : vector<64x8xf32>
    %cst_15 = arith.constant 1.000000e+00 : f32
    %52 = vector.broadcast %cst_15 : f32 to vector<64x8xf32>
    %53 = arith.subf %51, %52 : vector<64x8xf32>
    %54 = arith.select %50, %48, %53 : vector<64x8xi1>, vector<64x8xf32>
    %55 = vector.extract_strided_slice %8 {offsets = [0, 1], sizes = [64, 1], strides = [1, 1]} : vector<64x2xf32> to vector<64x1xf32>
    %56 = vector.extract_strided_slice %9 {offsets = [1, 0], sizes = [1, 64], strides = [1, 1]} : vector<2x64xf32> to vector<1x64xf32>
    %57 = vector.broadcast %55 : vector<64x1xf32> to vector<64x64xf32>
    %58 = vector.broadcast %56 : vector<1x64xf32> to vector<64x64xf32>
    %59 = arith.addf %57, %58 : vector<64x64xf32>
    %cst_16 = arith.constant 0.000000e+00 : f32
    %60 = vector.broadcast %cst_16 : f32 to vector<64x64xf32>
    %61 = arith.cmpf ogt, %59, %60 : vector<64x64xf32>
    %cst_17 = arith.constant 2.000000e-01 : f32
    %62 = vector.broadcast %cst_17 : f32 to vector<64x64xf32>
    %63 = arith.mulf %62, %59 : vector<64x64xf32>
    %64 = arith.select %61, %59, %63 : vector<64x64xi1>, vector<64x64xf32>
    %cst_18 = arith.constant -1.000000e+09 : f32
    %65 = vector.broadcast %cst_18 : f32 to vector<64x64xf32>
    %66 = arith.select %14, %64, %65 : vector<64x64xi1>, vector<64x64xf32>
    %cst_19 = arith.constant dense<0xFF800000> : vector<64xf32>
    %67 = vector.multi_reduction <maximumf>, %66, %cst_19 [1] : vector<64x64xf32> to vector<64xf32>
    %68 = vector.shape_cast %67 : vector<64xf32> to vector<64x1xf32>
    %69 = vector.broadcast %68 : vector<64x1xf32> to vector<64x64xf32>
    %70 = arith.subf %66, %69 : vector<64x64xf32>
    %71 = math.exp %70 : vector<64x64xf32>
    %cst_20 = arith.constant 0.000000e+00 : f32
    %72 = vector.broadcast %cst_20 : f32 to vector<64x64xf32>
    %73 = arith.select %14, %71, %72 : vector<64x64xi1>, vector<64x64xf32>
    %cst_21 = arith.constant dense<0.000000e+00> : vector<64xf32>
    %74 = vector.multi_reduction <add>, %73, %cst_21 [1] : vector<64x64xf32> to vector<64xf32>
    %75 = vector.shape_cast %74 : vector<64xf32> to vector<64x1xf32>
    %76 = tpu.reciprocal %75 {approx = true} : vector<64x1xf32> -> vector<64x1xf32>
    %77 = vector.broadcast %76 : vector<64x1xf32> to vector<64x64xf32>
    %78 = arith.mulf %73, %77 : vector<64x64xf32>
    %79 = arith.truncf %78 : vector<64x64xf32> to vector<64x64xbf16>
    %80 = vector.extract_strided_slice %18 {offsets = [0, 8], sizes = [64, 8], strides = [1, 1]} : vector<64x16xbf16> to vector<64x8xbf16>
    %cst_22 = arith.constant dense<0.000000e+00> : vector<64x8xf32>
    %81 = tpu.matmul %79, %80, %cst_22 {dimension_numbers = #tpu.dot_dimension_numbers<[1], [0], [0], [1], [0, 0, 1, 1], [], []>} : vector<64x64xbf16>, vector<64x8xbf16>, vector<64x8xf32> -> vector<64x8xf32>
    %82 = vector.extract_strided_slice %17 {offsets = [0, 8], sizes = [1, 8], strides = [1, 1]} : vector<1x16xf32> to vector<1x8xf32>
    %83 = vector.broadcast %82 : vector<1x8xf32> to vector<64x8xf32>
    %84 = arith.addf %81, %83 : vector<64x8xf32>
    %cst_23 = arith.constant 0.000000e+00 : f32
    %85 = vector.broadcast %cst_23 : f32 to vector<64x8xf32>
    %86 = arith.cmpf ogt, %84, %85 : vector<64x8xf32>
    %87 = math.exp %84 : vector<64x8xf32>
    %cst_24 = arith.constant 1.000000e+00 : f32
    %88 = vector.broadcast %cst_24 : f32 to vector<64x8xf32>
    %89 = arith.subf %87, %88 : vector<64x8xf32>
    %90 = arith.select %86, %84, %89 : vector<64x8xi1>, vector<64x8xf32>
    %91 = tpu.concatenate %54, %90 in 1 : vector<64x8xf32>, vector<64x8xf32> -> vector<64x16xf32>
    %92 = arith.truncf %91 : vector<64x16xf32> to vector<64x16xbf16>
    %93 = arith.index_cast %arg0 : i32 to index
    %c0_25 = arith.constant 0 : index
    %c0_26 = arith.constant 0 : index
    %94 = vector.load %arg10[%93, %c0_25, %c0_26] : memref<2x64x16xbf16, #tpu.memory_space<vmem>>, vector<1x64x16xbf16>
    %95 = vector.shape_cast %94 : vector<1x64x16xbf16> to vector<64x16xbf16>
    %96 = vector.shape_cast %92 : vector<64x16xbf16> to vector<1x64x16xbf16>
    tpu.vector_store %arg10[%93, %c0_25, %c0_26], %96 {strides = array<i32>} : memref<2x64x16xbf16, #tpu.memory_space<vmem>>, vector<1x64x16xbf16>,
    %c1_i32 = arith.constant 1 : i32
    %97 = arith.cmpi eq, %arg0, %c1_i32 : i32
    %98 = arith.extui %97 : i1 to i32
    %c0_i32_27 = arith.constant 0 : i32
    %99 = arith.cmpi ne, %98, %c0_i32_27 : i32
    scf.if %99 {
      %c0_28 = arith.constant 0 : index
      %c0_29 = arith.constant 0 : index
      %c0_30 = arith.constant 0 : index
      %100 = vector.load %arg10[%c0_28, %c0_29, %c0_30] : memref<2x64x16xbf16, #tpu.memory_space<vmem>>, vector<2x64x16xbf16>
      %101 = vector.shape_cast %100 : vector<2x64x16xbf16> to vector<128x16xbf16>
      %c0_31 = arith.constant 0 : index
      %c0_32 = arith.constant 0 : index
      %102 = vector.load %arg5[%c0_31, %c0_32] : memref<16x128xbf16, #tpu.memory_space<vmem>>, vector<16x128xbf16>
      %cst_33 = arith.constant dense<0.000000e+00> : vector<128x128xf32>
      %103 = tpu.matmul %101, %102, %cst_33 {dimension_numbers = #tpu.dot_dimension_numbers<[1], [0], [0], [1], [0, 0, 1, 1], [], []>} : vector<128x16xbf16>, vector<16x128xbf16>, vector<128x128xf32> -> vector<128x128xf32>
      %c0_34 = arith.constant 0 : index
      %c0_35 = arith.constant 0 : index
      %104 = vector.load %arg6[%c0_34, %c0_35] : memref<1x128xf32, #tpu.memory_space<vmem>>, vector<1x128xf32>
      %105 = vector.broadcast %104 : vector<1x128xf32> to vector<128x128xf32>
      %106 = arith.addf %103, %105 : vector<128x128xf32>
      %107 = math.tanh %106 : vector<128x128xf32>
      %108 = vector.extract_strided_slice %107 {offsets = [0, 0], sizes = [64, 128], strides = [1, 1]} : vector<128x128xf32> to vector<64x128xf32>
      %cst_36 = arith.constant dense<0.000000e+00> : vector<128xf32>
      %109 = vector.multi_reduction <add>, %108, %cst_36 [0] : vector<64x128xf32> to vector<128xf32>
      %110 = vector.shape_cast %109 : vector<128xf32> to vector<1x128xf32>
      %cst_37 = arith.constant 6.400000e+01 : f32
      %111 = vector.broadcast %cst_37 : f32 to vector<1x128xf32>
      %112 = arith.divf %110, %111 : vector<1x128xf32>
      %c0_38 = arith.constant 0 : index
      %c0_39 = arith.constant 0 : index
      %113 = vector.load %arg7[%c0_38, %c0_39] : memref<1x128xf32, #tpu.memory_space<vmem>>, vector<1x128xf32>
      %114 = arith.mulf %112, %113 : vector<1x128xf32>
      %cst_40 = arith.constant dense<0.000000e+00> : vector<1xf32>
      %115 = vector.multi_reduction <add>, %114, %cst_40 [1] : vector<1x128xf32> to vector<1xf32>
      %116 = vector.shape_cast %115 : vector<1xf32> to vector<1x1xf32>
      %117 = vector.extract_strided_slice %107 {offsets = [64, 0], sizes = [64, 128], strides = [1, 1]} : vector<128x128xf32> to vector<64x128xf32>
      %cst_41 = arith.constant dense<0.000000e+00> : vector<128xf32>
      %118 = vector.multi_reduction <add>, %117, %cst_41 [0] : vector<64x128xf32> to vector<128xf32>
      %119 = vector.shape_cast %118 : vector<128xf32> to vector<1x128xf32>
      %cst_42 = arith.constant 6.400000e+01 : f32
      %120 = vector.broadcast %cst_42 : f32 to vector<1x128xf32>
      %121 = arith.divf %119, %120 : vector<1x128xf32>
      %c0_43 = arith.constant 0 : index
      %c0_44 = arith.constant 0 : index
      %122 = vector.load %arg7[%c0_43, %c0_44] : memref<1x128xf32, #tpu.memory_space<vmem>>, vector<1x128xf32>
      %123 = arith.mulf %121, %122 : vector<1x128xf32>
      %cst_45 = arith.constant dense<0.000000e+00> : vector<1xf32>
      %124 = vector.multi_reduction <add>, %123, %cst_45 [1] : vector<1x128xf32> to vector<1xf32>
      %125 = vector.shape_cast %124 : vector<1xf32> to vector<1x1xf32>
      %126 = tpu.concatenate %116, %125 in 1 : vector<1x1xf32>, vector<1x1xf32> -> vector<1x2xf32>
      %cst_46 = arith.constant dense<0xFF800000> : vector<1xf32>
      %127 = vector.multi_reduction <maximumf>, %126, %cst_46 [1] : vector<1x2xf32> to vector<1xf32>
      %cst_47 = arith.constant 0xFF800000 : f32
      %128 = vector.broadcast %cst_47 : f32 to vector<1xf32>
      %129 = arith.maximumf %128, %127 : vector<1xf32>
      %130 = vector.shape_cast %129 : vector<1xf32> to vector<1x1xf32>
      %131 = vector.broadcast %130 : vector<1x1xf32> to vector<1x2xf32>
      %132 = arith.subf %126, %131 : vector<1x2xf32>
      %133 = math.exp %132 : vector<1x2xf32>
      %cst_48 = arith.constant dense<0.000000e+00> : vector<1xf32>
      %134 = vector.multi_reduction <add>, %133, %cst_48 [1] : vector<1x2xf32> to vector<1xf32>
      %135 = vector.shape_cast %134 : vector<1xf32> to vector<1x1xf32>
      %136 = vector.broadcast %135 : vector<1x1xf32> to vector<1x2xf32>
      %137 = arith.divf %133, %136 : vector<1x2xf32>
      %138 = vector.extract_strided_slice %137 {offsets = [0, 0], sizes = [1, 1], strides = [1, 1]} : vector<1x2xf32> to vector<1x1xf32>
      %139 = vector.extract_strided_slice %100 {offsets = [0, 0, 0], sizes = [1, 64, 16], strides = [1, 1, 1]} : vector<2x64x16xbf16> to vector<1x64x16xbf16>
      %140 = vector.shape_cast %139 : vector<1x64x16xbf16> to vector<64x16xbf16>
      %141 = arith.extf %140 : vector<64x16xbf16> to vector<64x16xf32>
      %142 = vector.broadcast %138 : vector<1x1xf32> to vector<64x16xf32>
      %143 = arith.mulf %142, %141 : vector<64x16xf32>
      %144 = vector.extract_strided_slice %137 {offsets = [0, 1], sizes = [1, 1], strides = [1, 1]} : vector<1x2xf32> to vector<1x1xf32>
      %145 = vector.extract_strided_slice %100 {offsets = [1, 0, 0], sizes = [1, 64, 16], strides = [1, 1, 1]} : vector<2x64x16xbf16> to vector<1x64x16xbf16>
      %146 = vector.shape_cast %145 : vector<1x64x16xbf16> to vector<64x16xbf16>
      %147 = arith.extf %146 : vector<64x16xbf16> to vector<64x16xf32>
      %148 = vector.broadcast %144 : vector<1x1xf32> to vector<64x16xf32>
      %149 = arith.mulf %148, %147 : vector<64x16xf32>
      %150 = arith.addf %143, %149 : vector<64x16xf32>
      %cst_49 = arith.constant 0.000000e+00 : f32
      %151 = vector.broadcast %cst_49 : f32 to vector<64x112xf32>
      %152 = tpu.concatenate %150, %151 in 1 : vector<64x16xf32>, vector<64x112xf32> -> vector<64x128xf32>
      %153 = arith.truncf %152 : vector<64x128xf32> to vector<64x128xbf16>
      %c0_50 = arith.constant 0 : index
      %c0_51 = arith.constant 0 : index
      %154 = vector.load %arg8[%c0_50, %c0_51] : memref<64x128xbf16, #tpu.memory_space<vmem>>, vector<64x128xbf16>
      tpu.vector_store %arg8[%c0_50, %c0_51], %153 {strides = array<i32>} : memref<64x128xbf16, #tpu.memory_space<vmem>>, vector<64x128xbf16>,
    } else {
    }
    return
  }
  func.func @transform_0(%arg0: i32) -> (i32, i32, i32) {
    %c0_i32 = arith.constant 0 : i32
    %c0_i32_0 = arith.constant 0 : i32
    %c0_i32_1 = arith.constant 0 : i32
    return %arg0, %c0_i32, %c0_i32_0 : i32, i32, i32
  }
  func.func @transform_1(%arg0: i32) -> (i32, i32) {
    %c0_i32 = arith.constant 0 : i32
    %c0_i32_0 = arith.constant 0 : i32
    %c0_i32_1 = arith.constant 0 : i32
    return %c0_i32, %c0_i32_0 : i32, i32
  }
  func.func @transform_2(%arg0: i32) -> (i32, i32, i32) {
    %c0_i32 = arith.constant 0 : i32
    %c0_i32_0 = arith.constant 0 : i32
    %c0_i32_1 = arith.constant 0 : i32
    %c0_i32_2 = arith.constant 0 : i32
    return %c0_i32, %c0_i32_0, %c0_i32_1 : i32, i32, i32
  }
  func.func @transform_3(%arg0: i32) -> (i32, i32) {
    %c0_i32 = arith.constant 0 : i32
    %c0_i32_0 = arith.constant 0 : i32
    %c0_i32_1 = arith.constant 0 : i32
    return %c0_i32, %c0_i32_0 : i32, i32
  }
  func.func @transform_4(%arg0: i32) -> (i32, i32) {
    %c0_i32 = arith.constant 0 : i32
    %c0_i32_0 = arith.constant 0 : i32
    %c0_i32_1 = arith.constant 0 : i32
    return %c0_i32, %c0_i32_0 : i32, i32
  }
  func.func @transform_5(%arg0: i32) -> (i32, i32) {
    %c0_i32 = arith.constant 0 : i32
    %c0_i32_0 = arith.constant 0 : i32
    %c0_i32_1 = arith.constant 0 : i32
    return %c0_i32, %c0_i32_0 : i32, i32
  }
  func.func @transform_6(%arg0: i32) -> (i32, i32) {
    %c0_i32 = arith.constant 0 : i32
    %c0_i32_0 = arith.constant 0 : i32
    %c0_i32_1 = arith.constant 0 : i32
    return %c0_i32, %c0_i32_0 : i32, i32
  }
  func.func @transform_7(%arg0: i32) -> (i32, i32) {
    %c0_i32 = arith.constant 0 : i32
    %c0_i32_0 = arith.constant 0 : i32
    %c0_i32_1 = arith.constant 0 : i32
    return %c0_i32, %c0_i32_0 : i32, i32
  }
}

</mosaic_0001>

<llo_original>
// kernel: tpu_custom_call.1
$region0: #{tpu_custom_call.1}
  #allocation0 [shape = 'u32[]', space=smem, size = 0x4, offset = 0x4, fixed_abs, tag = 'smem constant byte address 0x4 - core index']
  #allocation1 [shape = 'u32[144,128]{1,0:T(1,128)}', space=vmem, size = 0x12000, scoped, tag = 'internal scratch']
  #allocation2 [shape = 'f32[2,64,128]{2,1,0:T(8,128)}', space=vmem, size = 0x10000, scoped, tag = 'scratch operand']
  #allocation3 [shape = 'bf16[2,64,16]{2,1,0:T(16,128)(2,1)}', space=vmem, size = 0x8000, scoped, tag = 'scratch operand']
  %s0 = inlined_call_operand.hbm [shape: s8[2,64,64], index: 0, kind: input, shape index: {}]
  %s1 = inlined_call_operand.hbm [shape: bf16[128,256], index: 1, kind: input, shape index: {}]
  %s2 = inlined_call_operand.vmem [shape: f32[2,1,16], index: 2, kind: input, shape index: {}]
  %s3 = inlined_call_operand.hbm [shape: bf16[64,128], index: 3, kind: input, shape index: {}]
  %s4 = inlined_call_operand.vmem [shape: bf16[16,128], index: 4, kind: input, shape index: {}]
  %s5 = inlined_call_operand.vmem [shape: f32[1,128], index: 5, kind: input, shape index: {}]
  %s6 = inlined_call_operand.vmem [shape: f32[1,128], index: 6, kind: input, shape index: {}]
  %s7 = inlined_call_operand.hbm [shape: bf16[64,128], index: 7, kind: output, shape index: {}]
  %s8 = sld [smem:[#allocation0]]
  $region81: #{tpu_custom_call.1} parent=0
    _
  %s10 = ssub.s32 1, %s8
  %s11 = scalar_select 0, %s10, %s8
  $region1: #{tpu_custom_call.1} parent=0
    #allocation4 [shape = 'u8[16384]{0}', space=vmem, size = 0x4000, scoped, tag = 'input window, operand 0']
    #allocation5 [shape = 's32[2]{0}', space=sflag, size = 0x8, scoped, tag = 'scoped memory for tpu_custom_call.1']
    #allocation6 [shape = 's32[2]{0}', space=sflag, size = 0x8, scoped, tag = 'scoped memory for tpu_custom_call.1']
    #allocation7 [shape = 'u8[65536]{0}', space=vmem, size = 0x10000, scoped, tag = 'input window, operand 1, single buffered']
    #allocation8 [shape = 's32[1]{0}', space=sflag, size = 0x4, scoped, tag = 'scoped memory for tpu_custom_call.1']
    #allocation9 [shape = 'u8[16384]{0}', space=vmem, size = 0x4000, scoped, tag = 'input window, operand 3, single buffered']
    #allocation10 [shape = 'u8[16384]{0}', space=vmem, size = 0x4000, scoped, tag = 'output window, operand 0, single buffered']
    %12 = vsyncpa [#allocation5], 0
    %s13 = scalar_lea.sflag [#allocation5], 1
    %14 = vsyncpa %s13, 0
    %15 = vsyncpa [#allocation8], 0
    %16 = vsyncpa [#allocation6], 0
    loop: start=0, step=1, limit=4
    $region2: #{tpu_custom_call.1} parent=1 // loop_pre_header
      _
    $region3: #{tpu_custom_call.1} parent=1 // loop_header
      %s18 = sphi 0, %s22
      %p19 = scmp.ge.s32.totalorder %s18, 4
      %s28 = sphi 0, %s30
      %s31 = sphi 0, %s28
      %s32 = sphi 0, %s31
      %s48 = sphi 0, %s32
      %s52 = sphi 0, %s52
      %s54 = sphi 0, %s52
      %s55 = sphi 0, %s54
      %s69 = sphi 0, %s55
      %s73 = sphi 0, %s73
      %s75 = sphi 0, %s73
      %s76 = sphi 0, %s75
      %s90 = sphi 0, %s76
      %s94 = sphi 0, %s94
      %s96 = sphi 0, %s94
      %s97 = sphi 0, %s96
      %s111 = sphi 0, %s97
      %s115 = sphi 0, %s115
      %s117 = sphi 0, %s115
      %s118 = sphi 0, %s117
      %s132 = sphi 0, %s118
      %s136 = sphi 0, %s136
      %s138 = sphi 0, %s136
      %s139 = sphi 0, %s138
      %s153 = sphi 0, %s139
      %s157 = sphi 0, %s157
      %s159 = sphi 0, %s157
      %s160 = sphi 0, %s159
      %s174 = sphi 0, %s160
      %s178 = sphi 0, %s178
      %s180 = sphi 0, %s178
      %s181 = sphi 0, %s180
      %s195 = sphi 0, %s181
    $region4: #{tpu_custom_call.1} parent=1 // loop_header_branch
      %21 = sbr.rel (%p19) target = $region8
    $region5: #{tpu_custom_call.1} parent=1 // loop_body
      %s23 = ssub.s32 %s18, 1
      %s24 = ssub.s32 %s18, 2
      %s25 = sadd.s32 %s18, 1
      %s26 = ssub.s32 %s18, %s25
      %p27 = scmp.eq.s32.totalorder %s26, 0
      %s29 = sadd.s32 %s28, 1
      %s30 = scalar_select %p27, %s28, %s29
      %p33 = pneg %p27
      %p34 = scmp.eq.s32.totalorder %s18, 1
      %p35 = por %p33, %p34
      %p36 = scmp.ne.s32.totalorder %s28, %s31
      %p37 = scmp.eq.s32.totalorder %s18, 0
      %p38 = por %p36, %p37
      %p39 = scmp.ne.s32.totalorder %s28, %s31
      %p40 = scmp.eq.s32.totalorder %s23, 1
      %p41 = por %p39, %p40
      %p42 = scmp.ne.s32.totalorder %s31, %s32
      %p43 = scmp.eq.s32.totalorder %s23, 0
      %p44 = por %p42, %p43
      %p45 = scmp.ne.s32.totalorder %s31, %s32
      %p46 = scmp.eq.s32.totalorder %s24, 1
      %p47 = por %p45, %p46
      %p49 = scmp.ne.s32.totalorder %s32, %s48
      %p50 = scmp.eq.s32.totalorder %s24, 0
      %p51 = por %p49, %p50
      %s53 = sadd.s32 %s52, 1
      %p56 = scmp.eq.s32.totalorder %s18, 1
      %p57 = scmp.ne.s32.totalorder %s52, %s54
      %p58 = scmp.eq.s32.totalorder %s18, 0
      %p59 = por %p57, %p58
      %p60 = scmp.ne.s32.totalorder %s52, %s54
      %p61 = scmp.eq.s32.totalorder %s23, 1
      %p62 = por %p60, %p61
      %p63 = scmp.ne.s32.totalorder %s54, %s55
      %p64 = scmp.eq.s32.totalorder %s23, 0
      %p65 = por %p63, %p64
      %p66 = scmp.ne.s32.totalorder %s54, %s55
      %p67 = scmp.eq.s32.totalorder %s24, 1
      %p68 = por %p66, %p67
      %p70 = scmp.ne.s32.totalorder %s55, %s69
      %p71 = scmp.eq.s32.totalorder %s24, 0
      %p72 = por %p70, %p71
      %s74 = sadd.s32 %s73, 1
      %p77 = scmp.eq.s32.totalorder %s18, 1
      %p78 = scmp.ne.s32.totalorder %s73, %s75
      %p79 = scmp.eq.s32.totalorder %s18, 0
      %p80 = por %p78, %p79
      %p81 = scmp.ne.s32.totalorder %s73, %s75
      %p82 = scmp.eq.s32.totalorder %s23, 1
      %p83 = por %p81, %p82
      %p84 = scmp.ne.s32.totalorder %s75, %s76
      %p85 = scmp.eq.s32.totalorder %s23, 0
      %p86 = por %p84, %p85
      %p87 = scmp.ne.s32.totalorder %s75, %s76
      %p88 = scmp.eq.s32.totalorder %s24, 1
      %p89 = por %p87, %p88
      %p91 = scmp.ne.s32.totalorder %s76, %s90
      %p92 = scmp.eq.s32.totalorder %s24, 0
      %p93 = por %p91, %p92
      %s95 = sadd.s32 %s94, 1
      %p98 = scmp.eq.s32.totalorder %s18, 1
      %p99 = scmp.ne.s32.totalorder %s94, %s96
      %p100 = scmp.eq.s32.totalorder %s18, 0
      %p101 = por %p99, %p100
      %p102 = scmp.ne.s32.totalorder %s94, %s96
      %p103 = scmp.eq.s32.totalorder %s23, 1
      %p104 = por %p102, %p103
      %p105 = scmp.ne.s32.totalorder %s96, %s97
      %p106 = scmp.eq.s32.totalorder %s23, 0
      %p107 = por %p105, %p106
      %p108 = scmp.ne.s32.totalorder %s96, %s97
      %p109 = scmp.eq.s32.totalorder %s24, 1
      %p110 = por %p108, %p109
      %p112 = scmp.ne.s32.totalorder %s97, %s111
      %p113 = scmp.eq.s32.totalorder %s24, 0
      %p114 = por %p112, %p113
      %s116 = sadd.s32 %s115, 1
      %p119 = scmp.eq.s32.totalorder %s18, 1
      %p120 = scmp.ne.s32.totalorder %s115, %s117
      %p121 = scmp.eq.s32.totalorder %s18, 0
      %p122 = por %p120, %p121
      %p123 = scmp.ne.s32.totalorder %s115, %s117
      %p124 = scmp.eq.s32.totalorder %s23, 1
      %p125 = por %p123, %p124
      %p126 = scmp.ne.s32.totalorder %s117, %s118
      %p127 = scmp.eq.s32.totalorder %s23, 0
      %p128 = por %p126, %p127
      %p129 = scmp.ne.s32.totalorder %s117, %s118
      %p130 = scmp.eq.s32.totalorder %s24, 1
      %p131 = por %p129, %p130
      %p133 = scmp.ne.s32.totalorder %s118, %s132
      %p134 = scmp.eq.s32.totalorder %s24, 0
      %p135 = por %p133, %p134
      %s137 = sadd.s32 %s136, 1
      %p140 = scmp.eq.s32.totalorder %s18, 1
      %p141 = scmp.ne.s32.totalorder %s136, %s138
      %p142 = scmp.eq.s32.totalorder %s18, 0
      %p143 = por %p141, %p142
      %p144 = scmp.ne.s32.totalorder %s136, %s138
      %p145 = scmp.eq.s32.totalorder %s23, 1
      %p146 = por %p144, %p145
      %p147 = scmp.ne.s32.totalorder %s138, %s139
      %p148 = scmp.eq.s32.totalorder %s23, 0
      %p149 = por %p147, %p148
      %p150 = scmp.ne.s32.totalorder %s138, %s139
      %p151 = scmp.eq.s32.totalorder %s24, 1
      %p152 = por %p150, %p151
      %p154 = scmp.ne.s32.totalorder %s139, %s153
      %p155 = scmp.eq.s32.totalorder %s24, 0
      %p156 = por %p154, %p155
      %s158 = sadd.s32 %s157, 1
      %p161 = scmp.eq.s32.totalorder %s18, 1
      %p162 = scmp.ne.s32.totalorder %s157, %s159
      %p163 = scmp.eq.s32.totalorder %s18, 0
      %p164 = por %p162, %p163
      %p165 = scmp.ne.s32.totalorder %s157, %s159
      %p166 = scmp.eq.s32.totalorder %s23, 1
      %p167 = por %p165, %p166
      %p168 = scmp.ne.s32.totalorder %s159, %s160
      %p169 = scmp.eq.s32.totalorder %s23, 0
      %p170 = por %p168, %p169
      %p171 = scmp.ne.s32.totalorder %s159, %s160
      %p172 = scmp.eq.s32.totalorder %s24, 1
      %p173 = por %p171, %p172
      %p175 = scmp.ne.s32.totalorder %s160, %s174
      %p176 = scmp.eq.s32.totalorder %s24, 0
      %p177 = por %p175, %p176
      %s179 = sadd.s32 %s178, 1
      %p182 = scmp.eq.s32.totalorder %s18, 1
      %p183 = scmp.ne.s32.totalorder %s178, %s180
      %p184 = scmp.eq.s32.totalorder %s18, 0
      %p185 = por %p183, %p184
      %p186 = scmp.ne.s32.totalorder %s178, %s180
      %p187 = scmp.eq.s32.totalorder %s23, 1
      %p188 = por %p186, %p187
      %p189 = scmp.ne.s32.totalorder %s180, %s181
      %p190 = scmp.eq.s32.totalorder %s23, 0
      %p191 = por %p189, %p190
      %p192 = scmp.ne.s32.totalorder %s180, %s181
      %p193 = scmp.eq.s32.totalorder %s24, 1
      %p194 = por %p192, %p193
      %p196 = scmp.ne.s32.totalorder %s181, %s195
      %p197 = scmp.eq.s32.totalorder %s24, 0
      %p198 = por %p196, %p197
      %p199 = scmp.le.s32.totalorder 1, %s18
      %p200 = scmp.lt.s32.totalorder %s18, 3
      %p201 = pnand %p199, %p200
      %p202 = pneg %p201
      // Predicated region
      $region9: #{tpu_custom_call.1} parent=5 // pred_check
        _
      $region10: #{tpu_custom_call.1} parent=5 // pred_check_branch
        %204 = sbr.rel (%p201) target = $region12
      $region11: #{tpu_custom_call.1} parent=5 // pred_region
        %s205 = ssub.s32 %s18, 1
        // Predicated region
        $region13: #{tpu_custom_call.1} parent=11 // pred_check
          %p206 = pneg %p65
        $region14: #{tpu_custom_call.1} parent=11 // pred_check_branch
          %208 = sbr.rel (%p206) target = $region16
        $region15: #{tpu_custom_call.1} parent=11 // pred_region
          %s210 = ssub.s32 2048, 2048
          %211 = vsyncadd [#allocation8], %s210
          %s212 = sshll.u32 [#allocation7], 4
          %s213 = int_to_ptr.vmem [resolvable:$true] %s212
          %218 = dma.hbm_to_vmem [thread:$0]  %s1, 2048, %s213, [#allocation8], 128, 128, 8
        $region16: #{tpu_custom_call.1} parent=11 // pred_fallthru
          _
        // Predicated region
        $region17: #{tpu_custom_call.1} parent=11 // pred_check
          %p219 = pneg %p86
        $region18: #{tpu_custom_call.1} parent=11 // pred_check_branch
          %221 = sbr.rel (%p219) target = $region20
        $region19: #{tpu_custom_call.1} parent=11 // pred_region
          _
        $region20: #{tpu_custom_call.1} parent=11 // pred_fallthru
          _
        // Predicated region
        $region21: #{tpu_custom_call.1} parent=11 // pred_check
          %p222 = pneg %p107
        $region22: #{tpu_custom_call.1} parent=11 // pred_check_branch
          %224 = sbr.rel (%p222) target = $region24
        $region23: #{tpu_custom_call.1} parent=11 // pred_region
          %s226 = ssub.s32 512, 512
          %227 = vsyncadd [#allocation8], %s226
          %s228 = sshll.u32 [#allocation9], 4
          %s229 = int_to_ptr.vmem [resolvable:$true] %s228
          %234 = dma.hbm_to_vmem [thread:$0]  %s3, 512, %s229, [#allocation8], 64, 64, 4
        $region24: #{tpu_custom_call.1} parent=11 // pred_fallthru
          _
        // Predicated region
        $region25: #{tpu_custom_call.1} parent=11 // pred_check
          %p235 = pneg %p128
        $region26: #{tpu_custom_call.1} parent=11 // pred_check_branch
          %237 = sbr.rel (%p235) target = $region28
        $region27: #{tpu_custom_call.1} parent=11 // pred_region
          _
        $region28: #{tpu_custom_call.1} parent=11 // pred_fallthru
          _
        // Predicated region
        $region29: #{tpu_custom_call.1} parent=11 // pred_check
          %p238 = pneg %p149
        $region30: #{tpu_custom_call.1} parent=11 // pred_check_branch
          %240 = sbr.rel (%p238) target = $region32
        $region31: #{tpu_custom_call.1} parent=11 // pred_region
          _
        $region32: #{tpu_custom_call.1} parent=11 // pred_fallthru
          _
        // Predicated region
        $region33: #{tpu_custom_call.1} parent=11 // pred_check
          %p241 = pneg %p170
        $region34: #{tpu_custom_call.1} parent=11 // pred_check_branch
          %243 = sbr.rel (%p241) target = $region36
        $region35: #{tpu_custom_call.1} parent=11 // pred_region
          _
        $region36: #{tpu_custom_call.1} parent=11 // pred_fallthru
          _
      $region12: #{tpu_custom_call.1} parent=5 // pred_fallthru
        _
      %p244 = scmp.lt.s32.totalorder %s18, 2
      // Predicated region
      $region37: #{tpu_custom_call.1} parent=5 // pred_check
        %p245 = pneg %p244
      $region38: #{tpu_custom_call.1} parent=5 // pred_check_branch
        %247 = sbr.rel (%p245) target = $region40
      $region39: #{tpu_custom_call.1} parent=5 // pred_region
        // Predicated region
        $region41: #{tpu_custom_call.1} parent=39 // pred_check
          %p248 = pneg %p38
        $region42: #{tpu_custom_call.1} parent=39 // pred_check_branch
          %250 = sbr.rel (%p248) target = $region44
        $region43: #{tpu_custom_call.1} parent=39 // pred_region
          %s251 = sand.u32 %s28, 1
          %s252 = scalar_lea.sflag [#allocation5], %s251
          %s253 = sand.u32 %s28, 1
          %s254 = smul.addr %s253, 16
          %s255 = scalar_lea.vmem [#allocation4], %s254
          %s257 = ssub.s32 256, 256
          %258 = vsyncadd %s252, %s257
          %s259 = smul.addr %s18, 2
          %s260 = smul.addr %s259, 128
          %s261 = scalar_lea.hbm %s0, %s260
          %s262 = sshll.u32 %s255, 4
          %s263 = int_to_ptr.vmem [resolvable:$true] %s262
          %268 = dma.hbm_to_vmem [thread:$0]  %s261, 256, %s263, %s252, 128, 128, 8
        $region44: #{tpu_custom_call.1} parent=39 // pred_fallthru
          _
      $region40: #{tpu_custom_call.1} parent=5 // pred_fallthru
        _
      %p269 = scmp.le.s32.totalorder 1, %s18
      %p270 = scmp.lt.s32.totalorder %s18, 3
      %p271 = pnand %p269, %p270
      %p272 = pneg %p271
      // Predicated region
      $region45: #{tpu_custom_call.1} parent=5 // pred_check
        _
      $region46: #{tpu_custom_call.1} parent=5 // pred_check_branch
        %274 = sbr.rel (%p271) target = $region48
      $region47: #{tpu_custom_call.1} parent=5 // pred_region
        %s275 = ssub.s32 %s18, 1
        %s276 = sand.u32 %s31, 1
        %s277 = scalar_lea.sflag [#allocation5], %s276
        %s278 = sand.u32 %s31, 1
        %s279 = smul.addr %s278, 16
        %s280 = scalar_lea.vmem [#allocation4], %s279
        // Predicated region
        $region49: #{tpu_custom_call.1} parent=47 // pred_check
          %p281 = pneg %p44
        $region50: #{tpu_custom_call.1} parent=47 // pred_check_branch
          %283 = sbr.rel (%p281) target = $region52
        $region51: #{tpu_custom_call.1} parent=47 // pred_region
          %284 = dma.done %s277, 256
        $region52: #{tpu_custom_call.1} parent=47 // pred_fallthru
          _
        // Predicated region
        $region53: #{tpu_custom_call.1} parent=47 // pred_check
          %p285 = pneg %p65
        $region54: #{tpu_custom_call.1} parent=47 // pred_check_branch
          %287 = sbr.rel (%p285) target = $region56
        $region55: #{tpu_custom_call.1} parent=47 // pred_region
          %288 = dma.done [#allocation8], 2048
        $region56: #{tpu_custom_call.1} parent=47 // pred_fallthru
          _
        // Predicated region
        $region57: #{tpu_custom_call.1} parent=47 // pred_check
          %p289 = pneg %p107
        $region58: #{tpu_custom_call.1} parent=47 // pred_check_branch
          %291 = sbr.rel (%p289) target = $region60
        $region59: #{tpu_custom_call.1} parent=47 // pred_region
          %292 = dma.done [#allocation8], 512
        $region60: #{tpu_custom_call.1} parent=47 // pred_fallthru
          _
        %s293 = sand.u32 %s31, 1
        %s294 = scalar_lea.sflag [#allocation5], %s293
        %s295 = sand.u32 %s31, 1
        %s296 = smul.addr %s295, 16
        %s297 = scalar_lea.vmem [#allocation4], %s296
        %p298 = pneg %p44
        %p299 = pneg %p41
        %p300 = pneg %p65
        %p301 = pneg %p62
        %p302 = pneg %p86
        %p303 = pneg %p83
        %p304 = pneg %p107
        %p305 = pneg %p104
        %p306 = pneg %p128
        %p307 = pneg %p125
        %p308 = pneg %p149
        %p309 = pneg %p146
        %p310 = pneg %p170
        %p311 = pneg %p167
        %p312 = pneg %p191
        %p313 = pneg %p188
        %p315 = scmp.eq.s32.totalorder %s23, 0
        // Predicated region
        $region61: #{tpu_custom_call.1} parent=47 // pred_check
          %p316 = pneg %p315
        $region62: #{tpu_custom_call.1} parent=47 // pred_check_branch
          %318 = sbr.rel (%p316) target = $region64
        $region63: #{tpu_custom_call.1} parent=47 // pred_region
          %v319 = vld [vmem:[#allocation9] sm:$0xf]
          %v320 = vld [vmem:[#allocation9 + $0x4] sm:$0xf]
          %v321 = vld [vmem:[#allocation9 + $0x8] sm:$0xf]
          %v322 = vld [vmem:[#allocation9 + $0xc] sm:$0xf]
          %v323 = vld [vmem:[#allocation9 + $0x10] sm:$0xf]
          %v324 = vld [vmem:[#allocation9 + $0x14] sm:$0xf]
          %v325 = vld [vmem:[#allocation9 + $0x18] sm:$0xf]
          %v326 = vld [vmem:[#allocation9 + $0x1c] sm:$0xf]
          %v327 = vld [vmem:[#allocation7] sm:$0xff]
          %v328 = vld [vmem:[#allocation7 + $0x8] sm:$0xff]
          %v329 = vld [vmem:[#allocation7 + $0x10] sm:$0xff]
          %v330 = vld [vmem:[#allocation7 + $0x18] sm:$0xff]
          %v331 = vld [vmem:[#allocation7 + $0x20] sm:$0xff]
          %v332 = vld [vmem:[#allocation7 + $0x28] sm:$0xff]
          %v333 = vld [vmem:[#allocation7 + $0x30] sm:$0xff]
          %v334 = vld [vmem:[#allocation7 + $0x38] sm:$0xff]
          %v335 = vld [vmem:[#allocation7 + $0x40] sm:$0xff]
          %v336 = vld [vmem:[#allocation7 + $0x48] sm:$0xff]
          %v337 = vld [vmem:[#allocation7 + $0x50] sm:$0xff]
          %v338 = vld [vmem:[#allocation7 + $0x58] sm:$0xff]
          %v339 = vld [vmem:[#allocation7 + $0x60] sm:$0xff]
          %v340 = vld [vmem:[#allocation7 + $0x68] sm:$0xff]
          %v341 = vld [vmem:[#allocation7 + $0x70] sm:$0xff]
          %v342 = vld [vmem:[#allocation7 + $0x78] sm:$0xff]
          %v351 = vunpack.c.l.b16 %v319
          %v352 = vunpack.c.l.b16 %v320
          %v353 = vunpack.c.l.b16 %v321
          %v354 = vunpack.c.l.b16 %v322
          %v355 = vunpack.c.l.b16 %v323
          %v356 = vunpack.c.l.b16 %v324
          %v357 = vunpack.c.l.b16 %v325
          %v358 = vunpack.c.l.b16 %v326
          %v359 = vpack.c.b16 %v352, %v351
          %v360 = vpack.c.b16 %v354, %v353
          %v361 = vpack.c.b16 %v356, %v355
          %v362 = vpack.c.b16 %v358, %v357
          %v383 = vunpack.c.l.b16 %v327
          %v384 = vunpack.c.h.b16 %v327
          %v385 = vunpack.c.l.b16 %v328
          %v386 = vunpack.c.h.b16 %v328
          %v387 = vunpack.c.l.b16 %v329
          %v388 = vunpack.c.h.b16 %v329
          %v389 = vunpack.c.l.b16 %v330
          %v390 = vunpack.c.h.b16 %v330
          %v391 = vunpack.c.l.b16 %v331
          %v392 = vunpack.c.h.b16 %v331
          %v393 = vunpack.c.l.b16 %v332
          %v394 = vunpack.c.h.b16 %v332
          %v395 = vunpack.c.l.b16 %v333
          %v396 = vunpack.c.h.b16 %v333
          %v397 = vunpack.c.l.b16 %v334
          %v398 = vunpack.c.h.b16 %v334
          %v399 = vunpack.c.l.b16 %v335
          %v400 = vunpack.c.h.b16 %v335
          %v401 = vunpack.c.l.b16 %v336
          %v402 = vunpack.c.h.b16 %v336
          %v403 = vunpack.c.l.b16 %v337
          %v404 = vunpack.c.h.b16 %v337
          %v405 = vunpack.c.l.b16 %v338
          %v406 = vunpack.c.h.b16 %v338
          %v407 = vunpack.c.l.b16 %v339
          %v408 = vunpack.c.h.b16 %v339
          %v409 = vunpack.c.l.b16 %v340
          %v410 = vunpack.c.h.b16 %v340
          %v411 = vunpack.c.l.b16 %v341
          %v412 = vunpack.c.h.b16 %v341
          %v413 = vunpack.c.l.b16 %v342
          %v414 = vunpack.c.h.b16 %v342
          %v415 = vpack.c.b16 %v385, %v383
          %v416 = vpack.c.b16 %v386, %v384
          %v417 = vpack.c.b16 %v389, %v387
          %v418 = vpack.c.b16 %v390, %v388
          %v419 = vpack.c.b16 %v393, %v391
          %v420 = vpack.c.b16 %v394, %v392
          %v421 = vpack.c.b16 %v397, %v395
          %v422 = vpack.c.b16 %v398, %v396
          %v423 = vpack.c.b16 %v401, %v399
          %v424 = vpack.c.b16 %v402, %v400
          %v425 = vpack.c.b16 %v405, %v403
          %v426 = vpack.c.b16 %v406, %v404
          %v427 = vpack.c.b16 %v409, %v407
          %v428 = vpack.c.b16 %v410, %v408
          %v429 = vpack.c.b16 %v413, %v411
          %v430 = vpack.c.b16 %v414, %v412
          %447 = vmatprep.subr.bf16.mxu0 %v416
          %448 = vmatpush1.bf16.msra.mxu0 %v415
          %449 = vmatprep.subr.bf16.mxu0 %v418
          %450 = vmatpush1.bf16.msra.mxu0 %v417
          %451 = vmatprep.subr.bf16.mxu0 %v420
          %452 = vmatpush1.bf16.msra.mxu0 %v419
          %453 = vmatprep.subr.bf16.mxu0 %v422
          %454 = vmatpush1.bf16.msra.mxu0 %v421
          %455 = vmatprep.subr.bf16.mxu0 %v424
          %456 = vmatpush1.bf16.msra.mxu0 %v423
          %457 = vmatprep.subr.bf16.mxu0 %v426
          %458 = vmatpush1.bf16.msra.mxu0 %v425
          %459 = vmatprep.subr.bf16.mxu0 %v428
          %460 = vmatpush1.bf16.msra.mxu0 %v427
          %461 = vmatprep.subr.bf16.mxu0 %v430
          %462 = vmatpush1.bf16.msra.mxu0 %v429
          %463 = vmatprep.subr.bf16.mxu0 0
          %464 = vmatpush1.bf16.msra.mxu0 0
          %465 = vmatprep.subr.bf16.mxu0 0
          %466 = vmatpush1.bf16.msra.mxu0 0
          %467 = vmatprep.subr.bf16.mxu0 0
          %468 = vmatpush1.bf16.msra.mxu0 0
          %469 = vmatprep.subr.bf16.mxu0 0
          %470 = vmatpush1.bf16.msra.mxu0 0
          %471 = vmatprep.subr.bf16.mxu0 0
          %472 = vmatpush1.bf16.msra.mxu0 0
          %473 = vmatprep.subr.bf16.mxu0 0
          %474 = vmatpush1.bf16.msra.mxu0 0
          %475 = vmatprep.subr.bf16.mxu0 0
          %476 = vmatpush1.bf16.msra.mxu0 0
          %477 = vmatprep.subr.bf16.mxu0 0
          %478 = vmatpush1.bf16.msra.mxu0 0
          %479 = vmatprep.mubr.bf16.mxu0 0
          %480 = vmatmul.mubr.bf16.gmra.mrb[0].mxu0 %v359
          %v481 = vpop.f32.mrb[0].mxu0
          %v482 = vadd.f32 0.0, %v481
          %v483 = vpop.f32.mrb[0].mxu0
          %v484 = vadd.f32 0.0, %v483
          %v485 = vpop.f32.mrb[0].mxu0
          %v486 = vadd.f32 0.0, %v485
          %v487 = vpop.f32.mrb[0].mxu0
          %v488 = vadd.f32 0.0, %v487
          %489 = vmatprep.mubr.bf16.mxu0 0
          %490 = vmatmul.mubr.bf16.gmra.mrb[0].mxu0 %v360
          %v491 = vpop.f32.mrb[0].mxu0
          %v492 = vadd.f32 0.0, %v491
          %v493 = vpop.f32.mrb[0].mxu0
          %v494 = vadd.f32 0.0, %v493
          %v495 = vpop.f32.mrb[0].mxu0
          %v496 = vadd.f32 0.0, %v495
          %v497 = vpop.f32.mrb[0].mxu0
          %v498 = vadd.f32 0.0, %v497
          %499 = vmatprep.mubr.bf16.mxu0 0
          %500 = vmatmul.mubr.bf16.gmra.mrb[0].mxu0 %v361
          %v501 = vpop.f32.mrb[0].mxu0
          %v502 = vadd.f32 0.0, %v501
          %v503 = vpop.f32.mrb[0].mxu0
          %v504 = vadd.f32 0.0, %v503
          %v505 = vpop.f32.mrb[0].mxu0
          %v506 = vadd.f32 0.0, %v505
          %v507 = vpop.f32.mrb[0].mxu0
          %v508 = vadd.f32 0.0, %v507
          %509 = vmatprep.mubr.bf16.mxu0 0
          %510 = vmatmul.mubr.bf16.gmra.mrb[0].mxu0 %v362
          %v511 = vpop.f32.mrb[0].mxu0
          %v512 = vadd.f32 0.0, %v511
          %v513 = vpop.f32.mrb[0].mxu0
          %v514 = vadd.f32 0.0, %v513
          %v515 = vpop.f32.mrb[0].mxu0
          %v516 = vadd.f32 0.0, %v515
          %v517 = vpop.f32.mrb[0].mxu0
          %v518 = vadd.f32 0.0, %v517
          %519 = vdwg.mxu0
          %520 = vst [vmem:[#allocation2] sm:$0xff] %v482
          %521 = vst [vmem:[#allocation2 + $0x8] sm:$0xff] %v486
          %522 = vst [vmem:[#allocation2 + $0x10] sm:$0xff] %v492
          %523 = vst [vmem:[#allocation2 + $0x18] sm:$0xff] %v496
          %524 = vst [vmem:[#allocation2 + $0x20] sm:$0xff] %v502
          %525 = vst [vmem:[#allocation2 + $0x28] sm:$0xff] %v506
          %526 = vst [vmem:[#allocation2 + $0x30] sm:$0xff] %v512
          %527 = vst [vmem:[#allocation2 + $0x38] sm:$0xff] %v516
          %s528 = scalar_lea.vmem [#allocation2], 64
          %529 = vst [vmem:[%s528] sm:$0xff] %v484
          %530 = vst [vmem:[%s528 + $0x8] sm:$0xff] %v488
          %531 = vst [vmem:[%s528 + $0x10] sm:$0xff] %v494
          %532 = vst [vmem:[%s528 + $0x18] sm:$0xff] %v498
          %533 = vst [vmem:[%s528 + $0x20] sm:$0xff] %v504
          %534 = vst [vmem:[%s528 + $0x28] sm:$0xff] %v508
          %535 = vst [vmem:[%s528 + $0x30] sm:$0xff] %v514
          %536 = vst [vmem:[%s528 + $0x38] sm:$0xff] %v518
        $region64: #{tpu_custom_call.1} parent=47 // pred_fallthru
          _
        %s537 = smul.u32 %s23, 64
        %s538 = scalar_lea.vmem [#allocation2], %s537
        %v539 = vld [vmem:[%s538] sm:$0xff]
        %v540 = vld [vmem:[%s538 + $0x8] sm:$0xff]
        %v541 = vld [vmem:[%s538 + $0x10] sm:$0xff]
        %v542 = vld [vmem:[%s538 + $0x18] sm:$0xff]
        %v543 = vld [vmem:[%s538 + $0x20] sm:$0xff]
        %v544 = vld [vmem:[%s538 + $0x28] sm:$0xff]
        %v545 = vld [vmem:[%s538 + $0x30] sm:$0xff]
        %v546 = vld [vmem:[%s538 + $0x38] sm:$0xff]
        %555 = vrot.lane.b32.xlu0 %v539, 112
        %v556 = vpop.permute.xlu0 %555
        %557 = vrot.lane.b32.xlu0 %v540, 112
        %v558 = vpop.permute.xlu0 %557
        %559 = vrot.lane.b32.xlu0 %v541, 112
        %v560 = vpop.permute.xlu0 %559
        %561 = vrot.lane.b32.xlu0 %v542, 112
        %v562 = vpop.permute.xlu0 %561
        %563 = vrot.lane.b32.xlu0 %v543, 112
        %v564 = vpop.permute.xlu0 %563
        %565 = vrot.lane.b32.xlu0 %v544, 112
        %v566 = vpop.permute.xlu0 %565
        %567 = vrot.lane.b32.xlu0 %v545, 112
        %v568 = vpop.permute.xlu0 %567
        %569 = vrot.lane.b32.xlu0 %v546, 112
        %v570 = vpop.permute.xlu0 %569
        %579 = vxpose.xlu0.b32.start [1/16] %v556, 128
        %580 = vxpose.xlu0.b32.cont [2/16] %v558, 128
        %581 = vxpose.xlu0.b32.cont [3/16] %v560, 128
        %582 = vxpose.xlu0.b32.cont [4/16] %v562, 128
        %583 = vxpose.xlu0.b32.cont [5/16] %v564, 128
        %584 = vxpose.xlu0.b32.cont [6/16] %v566, 128
        %585 = vxpose.xlu0.b32.cont [7/16] %v568, 128
        %586 = vxpose.xlu0.b32.cont [8/16] %v570, 128
        %587 = vxpose.xlu0.b32.cont [9/16] 0.0, 128
        %588 = vxpose.xlu0.b32.cont [10/16] 0.0, 128
        %589 = vxpose.xlu0.b32.cont [11/16] 0.0, 128
        %590 = vxpose.xlu0.b32.cont [12/16] 0.0, 128
        %591 = vxpose.xlu0.b32.cont [13/16] 0.0, 128
        %592 = vxpose.xlu0.b32.cont [14/16] 0.0, 128
        %593 = vxpose.xlu0.b32.cont [15/16] 0.0, 128
        %594 = vxpose.xlu0.b32.end [16/16] 0.0, 128
        %v595 = vpop.trf.xlu0
        %v596 = vpop.trf.xlu0
        %v597 = vpop.trf.xlu0
        %v598 = vpop.trf.xlu0
        %v599 = vpop.trf.xlu0
        %v600 = vpop.trf.xlu0
        %v601 = vpop.trf.xlu0
        %v602 = vpop.trf.xlu0
        %v603 = vpop.trf.xlu0
        %v604 = vpop.trf.xlu0
        %v605 = vpop.trf.xlu0
        %v606 = vpop.trf.xlu0
        %v607 = vpop.trf.xlu0
        %v608 = vpop.trf.xlu0
        %v609 = vpop.trf.xlu0
        %v610 = vpop.trf.xlu0
        %v611 = vld [vmem:[%s280] sm:$0xff]
        %v612 = vld [vmem:[%s280 + $0x8] sm:$0xff]
        %v613 = vunpack.c.0.s8 %v611
        %v614 = vunpack.c.1.s8 %v611
        %v615 = vunpack.c.2.s8 %v611
        %v616 = vunpack.c.3.s8 %v611
        %v617 = vunpack.c.0.s8 %v612
        %v618 = vunpack.c.1.s8 %v612
        %v619 = vunpack.c.2.s8 %v612
        %v620 = vunpack.c.3.s8 %v612
        %v621 = vcvt.s32.f32 %v613
        %v622 = vcvt.s32.f32 %v614
        %v623 = vcvt.s32.f32 %v615
        %v624 = vcvt.s32.f32 %v616
        %v625 = vcvt.s32.f32 %v617
        %v626 = vcvt.s32.f32 %v618
        %v627 = vcvt.s32.f32 %v619
        %v628 = vcvt.s32.f32 %v620
        %vm629 = vcmp.gt.f32.partialorder %v621, 0.0
        %vm630 = vcmp.gt.f32.partialorder %v622, 0.0
        %vm631 = vcmp.gt.f32.partialorder %v623, 0.0
        %vm632 = vcmp.gt.f32.partialorder %v624, 0.0
        %vm633 = vcmp.gt.f32.partialorder %v625, 0.0
        %vm634 = vcmp.gt.f32.partialorder %v626, 0.0
        %vm635 = vcmp.gt.f32.partialorder %v627, 0.0
        %vm636 = vcmp.gt.f32.partialorder %v628, 0.0
        %s637 = scalar_lea.vmem %s2, %s23
        %v638 = vld [vmem:[%s637] sm:$0x1]
        %v639 = vpack.c.bf16 %v540, %v539
        %v640 = vpack.c.bf16 %v542, %v541
        %v641 = vpack.c.bf16 %v544, %v543
        %v642 = vpack.c.bf16 %v546, %v545
        %643 = vset.pattern.permute.xlu0 18
        %644 = vperm.xlu0 %643, %v539
        %v645 = vpop.permute.xlu0 %644
        %647 = vset.pattern.permute.xlu0 18
        %648 = vperm.xlu0 %647, %v540
        %v649 = vpop.permute.xlu0 %648
        %651 = vset.pattern.permute.xlu0 18
        %652 = vperm.xlu0 %651, %v541
        %v653 = vpop.permute.xlu0 %652
        %655 = vset.pattern.permute.xlu0 18
        %656 = vperm.xlu0 %655, %v542
        %v657 = vpop.permute.xlu0 %656
        %659 = vset.pattern.permute.xlu0 18
        %660 = vperm.xlu0 %659, %v543
        %v661 = vpop.permute.xlu0 %660
        %663 = vset.pattern.permute.xlu0 18
        %664 = vperm.xlu0 %663, %v544
        %v665 = vpop.permute.xlu0 %664
        %667 = vset.pattern.permute.xlu0 18
        %668 = vperm.xlu0 %667, %v545
        %v669 = vpop.permute.xlu0 %668
        %671 = vset.pattern.permute.xlu0 18
        %672 = vperm.xlu0 %671, %v546
        %v673 = vpop.permute.xlu0 %672
        %v675 = vlaneseq
        %v676 = vshrl.u32 %v675, 7
        %v677 = vsub.s32 0, %v676
        %v678 = vrot.slane %v595, %v677
        %v679 = vadd.f32 %v645, %v678
        %v680 = vadd.f32 %v649, %v678
        %v681 = vadd.f32 %v653, %v678
        %v682 = vadd.f32 %v657, %v678
        %v683 = vadd.f32 %v661, %v678
        %v684 = vadd.f32 %v665, %v678
        %v685 = vadd.f32 %v669, %v678
        %v686 = vadd.f32 %v673, %v678
        %vm687 = vcmp.gt.f32.partialorder %v679, 0.0
        %vm688 = vcmp.gt.f32.partialorder %v680, 0.0
        %vm689 = vcmp.gt.f32.partialorder %v681, 0.0
        %vm690 = vcmp.gt.f32.partialorder %v682, 0.0
        %vm691 = vcmp.gt.f32.partialorder %v683, 0.0
        %vm692 = vcmp.gt.f32.partialorder %v684, 0.0
        %vm693 = vcmp.gt.f32.partialorder %v685, 0.0
        %vm694 = vcmp.gt.f32.partialorder %v686, 0.0
        %v695 = vmul.f32 %v679, 0.2
        %v696 = vmul.f32 %v680, 0.2
        %v697 = vmul.f32 %v681, 0.2
        %v698 = vmul.f32 %v682, 0.2
        %v699 = vmul.f32 %v683, 0.2
        %v700 = vmul.f32 %v684, 0.2
        %v701 = vmul.f32 %v685, 0.2
        %v702 = vmul.f32 %v686, 0.2
        %v703 = vsel %vm687, %v679, %v695
        %v704 = vsel %vm688, %v680, %v696
        %v705 = vsel %vm689, %v681, %v697
        %v706 = vsel %vm690, %v682, %v698
        %v707 = vsel %vm691, %v683, %v699
        %v708 = vsel %vm692, %v684, %v700
        %v709 = vsel %vm693, %v685, %v701
        %v710 = vsel %vm694, %v686, %v702
        %v711 = vsel %vm629, %v703, -1e+09
        %v712 = vsel %vm630, %v704, -1e+09
        %v713 = vsel %vm631, %v705, -1e+09
        %v714 = vsel %vm632, %v706, -1e+09
        %v715 = vsel %vm633, %v707, -1e+09
        %v716 = vsel %vm634, %v708, -1e+09
        %v717 = vsel %vm635, %v709, -1e+09
        %v718 = vsel %vm636, %v710, -1e+09
        %vm719 = vcmask 523264
        %v720 = vsel %vm719, %v711, -inf
        %721 = vmax.xlane.f32.xlu0 %v720
        %v722 = vpop.xlane.xlu0 %721
        %v723 = vsel %vm719, %v712, -inf
        %724 = vmax.xlane.f32.xlu0 %v723
        %v725 = vpop.xlane.xlu0 %724
        %v726 = vsel %vm719, %v713, -inf
        %727 = vmax.xlane.f32.xlu0 %v726
        %v728 = vpop.xlane.xlu0 %727
        %v729 = vsel %vm719, %v714, -inf
        %730 = vmax.xlane.f32.xlu0 %v729
        %v731 = vpop.xlane.xlu0 %730
        %v732 = vsel %vm719, %v715, -inf
        %733 = vmax.xlane.f32.xlu0 %v732
        %v734 = vpop.xlane.xlu0 %733
        %v735 = vsel %vm719, %v716, -inf
        %736 = vmax.xlane.f32.xlu0 %v735
        %v737 = vpop.xlane.xlu0 %736
        %v738 = vsel %vm719, %v717, -inf
        %739 = vmax.xlane.f32.xlu0 %v738
        %v740 = vpop.xlane.xlu0 %739
        %v741 = vsel %vm719, %v718, -inf
        %742 = vmax.xlane.f32.xlu0 %v741
        %v743 = vpop.xlane.xlu0 %742
        %v744 = vsub.f32 %v711, %v722
        %v745 = vsub.f32 %v712, %v725
        %v746 = vsub.f32 %v713, %v728
        %v747 = vsub.f32 %v714, %v731
        %v748 = vsub.f32 %v715, %v734
        %v749 = vsub.f32 %v716, %v737
        %v750 = vsub.f32 %v717, %v740
        %v751 = vsub.f32 %v718, %v743
        %v752 = vmul.f32 %v744, 1.442695
        %v753 = vpow.pop %v752
        %v754 = vmul.f32 %v745, 1.442695
        %v755 = vpow.pop %v754
        %v756 = vmul.f32 %v746, 1.442695
        %v757 = vpow.pop %v756
        %v758 = vmul.f32 %v747, 1.442695
        %v759 = vpow.pop %v758
        %v760 = vmul.f32 %v748, 1.442695
        %v761 = vpow.pop %v760
        %v762 = vmul.f32 %v749, 1.442695
        %v763 = vpow.pop %v762
        %v764 = vmul.f32 %v750, 1.442695
        %v765 = vpow.pop %v764
        %v766 = vmul.f32 %v751, 1.442695
        %v767 = vpow.pop %v766
        %v768 = vsel %vm629, %v753, 0.0
        %v769 = vsel %vm630, %v755, 0.0
        %v770 = vsel %vm631, %v757, 0.0
        %v771 = vsel %vm632, %v759, 0.0
        %v772 = vsel %vm633, %v761, 0.0
        %v773 = vsel %vm634, %v763, 0.0
        %v774 = vsel %vm635, %v765, 0.0
        %v775 = vsel %vm636, %v767, 0.0
        %v776 = vsel %vm719, %v768, 0.0
        %777 = vadd.xlane.f32.xlu0 %v776
        %v778 = vpop.xlane.xlu0 %777
        %v779 = vsel %vm719, %v769, 0.0
        %780 = vadd.xlane.f32.xlu0 %v779
        %v781 = vpop.xlane.xlu0 %780
        %v782 = vsel %vm719, %v770, 0.0
        %783 = vadd.xlane.f32.xlu0 %v782
        %v784 = vpop.xlane.xlu0 %783
        %v785 = vsel %vm719, %v771, 0.0
        %786 = vadd.xlane.f32.xlu0 %v785
        %v787 = vpop.xlane.xlu0 %786
        %v788 = vsel %vm719, %v772, 0.0
        %789 = vadd.xlane.f32.xlu0 %v788
        %v790 = vpop.xlane.xlu0 %789
        %v791 = vsel %vm719, %v773, 0.0
        %792 = vadd.xlane.f32.xlu0 %v791
        %v793 = vpop.xlane.xlu0 %792
        %v794 = vsel %vm719, %v774, 0.0
        %795 = vadd.xlane.f32.xlu0 %v794
        %v796 = vpop.xlane.xlu0 %795
        %v797 = vsel %vm719, %v775, 0.0
        %798 = vadd.xlane.f32.xlu0 %v797
        %v799 = vpop.xlane.xlu0 %798
        %v800 = vrcp.pop %v778
        %v801 = vrcp.pop %v781
        %v802 = vrcp.pop %v784
        %v803 = vrcp.pop %v787
        %v804 = vrcp.pop %v790
        %v805 = vrcp.pop %v793
        %v806 = vrcp.pop %v796
        %v807 = vrcp.pop %v799
        %v808 = vmul.f32 %v768, %v800
        %v809 = vmul.f32 %v769, %v801
        %v810 = vmul.f32 %v770, %v802
        %v811 = vmul.f32 %v771, %v803
        %v812 = vmul.f32 %v772, %v804
        %v813 = vmul.f32 %v773, %v805
        %v814 = vmul.f32 %v774, %v806
        %v815 = vmul.f32 %v775, %v807
        %v816 = vpack.c.bf16 %v809, %v808
        %v817 = vpack.c.bf16 %v811, %v810
        %v818 = vpack.c.bf16 %v813, %v812
        %v819 = vpack.c.bf16 %v815, %v814
        %v821 = vlaneseq
        %v822 = vshrl.u32 %v821, 7
        %v823 = vsub.s32 0, %v822
        %v824 = vrot.slane %v638, %v823
        %v827 = vsel %vm719, %v816, 0
        %v830 = vsel %vm719, %v817, 0
        %v833 = vsel %vm719, %v818, 0
        %v836 = vsel %vm719, %v819, 0
        %838 = vmatprep.subr.bf16.mxu0 0
        %839 = vmatpush1.bf16.msra.mxu0 %v639
        %840 = vmatprep.subr.bf16.mxu0 0
        %841 = vmatpush1.bf16.msra.mxu0 %v640
        %842 = vmatprep.subr.bf16.mxu0 0
        %843 = vmatpush1.bf16.msra.mxu0 %v641
        %844 = vmatprep.subr.bf16.mxu0 0
        %845 = vmatpush1.bf16.msra.mxu0 %v642
        %846 = vmatprep.subr.bf16.mxu0 0
        %847 = vmatpush1.bf16.msra.mxu0 0
        %848 = vmatprep.subr.bf16.mxu0 0
        %849 = vmatpush1.bf16.msra.mxu0 0
        %850 = vmatprep.subr.bf16.mxu0 0
        %851 = vmatpush1.bf16.msra.mxu0 0
        %852 = vmatprep.subr.bf16.mxu0 0
        %853 = vmatpush1.bf16.msra.mxu0 0
        %854 = vmatprep.subr.bf16.mxu0 0
        %855 = vmatpush1.bf16.msra.mxu0 0
        %856 = vmatprep.subr.bf16.mxu0 0
        %857 = vmatpush1.bf16.msra.mxu0 0
        %858 = vmatprep.subr.bf16.mxu0 0
        %859 = vmatpush1.bf16.msra.mxu0 0
        %860 = vmatprep.subr.bf16.mxu0 0
        %861 = vmatpush1.bf16.msra.mxu0 0
        %862 = vmatprep.subr.bf16.mxu0 0
        %863 = vmatpush1.bf16.msra.mxu0 0
        %864 = vmatprep.subr.bf16.mxu0 0
        %865 = vmatpush1.bf16.msra.mxu0 0
        %866 = vmatprep.subr.bf16.mxu0 0
        %867 = vmatpush1.bf16.msra.mxu0 0
        %868 = vmatprep.subr.bf16.mxu0 0
        %869 = vmatpush1.bf16.msra.mxu0 0
        %870 = vmatprep.mubr.bf16.mxu0 0
        %871 = vmatmul.mubr.bf16.gmra.mrb[0].mxu0 %v827
        %v872 = vpop.f32.mrb[0].mxu0
        %v873 = vadd.f32 %v824, %v872
        %v874 = vpop.f32.mrb[0].mxu0
        %v875 = vpop.f32.mrb[0].mxu0
        %v876 = vadd.f32 %v824, %v875
        %v877 = vpop.f32.mrb[0].mxu0
        %878 = vmatprep.mubr.bf16.mxu0 0
        %879 = vmatmul.mubr.bf16.gmra.mrb[0].mxu0 %v830
        %v880 = vpop.f32.mrb[0].mxu0
        %v881 = vadd.f32 %v824, %v880
        %v882 = vpop.f32.mrb[0].mxu0
        %v883 = vpop.f32.mrb[0].mxu0
        %v884 = vadd.f32 %v824, %v883
        %v885 = vpop.f32.mrb[0].mxu0
        %886 = vmatprep.mubr.bf16.mxu0 0
        %887 = vmatmul.mubr.bf16.gmra.mrb[0].mxu0 %v833
        %v888 = vpop.f32.mrb[0].mxu0
        %v889 = vadd.f32 %v824, %v888
        %v890 = vpop.f32.mrb[0].mxu0
        %v891 = vpop.f32.mrb[0].mxu0
        %v892 = vadd.f32 %v824, %v891
        %v893 = vpop.f32.mrb[0].mxu0
        %894 = vmatprep.mubr.bf16.mxu0 0
        %895 = vmatmul.mubr.bf16.gmra.mrb[0].mxu0 %v836
        %v896 = vpop.f32.mrb[0].mxu0
        %v897 = vadd.f32 %v824, %v896
        %v898 = vpop.f32.mrb[0].mxu0
        %v899 = vpop.f32.mrb[0].mxu0
        %v900 = vadd.f32 %v824, %v899
        %v901 = vpop.f32.mrb[0].mxu0
        %902 = vdwg.mxu0
        %vm903 = vcmp.gt.f32.partialorder %v873, 0.0
        %vm904 = vcmp.gt.f32.partialorder %v876, 0.0
        %vm905 = vcmp.gt.f32.partialorder %v881, 0.0
        %vm906 = vcmp.gt.f32.partialorder %v884, 0.0
        %vm907 = vcmp.gt.f32.partialorder %v889, 0.0
        %vm908 = vcmp.gt.f32.partialorder %v892, 0.0
        %vm909 = vcmp.gt.f32.partialorder %v897, 0.0
        %vm910 = vcmp.gt.f32.partialorder %v900, 0.0
        %v911 = vmul.f32 %v873, 1.442695
        %v912 = vpow.pop %v911
        %v913 = vmul.f32 %v876, 1.442695
        %v914 = vpow.pop %v913
        %v915 = vmul.f32 %v881, 1.442695
        %v916 = vpow.pop %v915
        %v917 = vmul.f32 %v884, 1.442695
        %v918 = vpow.pop %v917
        %v919 = vmul.f32 %v889, 1.442695
        %v920 = vpow.pop %v919
        %v921 = vmul.f32 %v892, 1.442695
        %v922 = vpow.pop %v921
        %v923 = vmul.f32 %v897, 1.442695
        %v924 = vpow.pop %v923
        %v925 = vmul.f32 %v900, 1.442695
        %v926 = vpow.pop %v925
        %v927 = vsub.f32 %v912, 1.0
        %v928 = vsub.f32 %v914, 1.0
        %v929 = vsub.f32 %v916, 1.0
        %v930 = vsub.f32 %v918, 1.0
        %v931 = vsub.f32 %v920, 1.0
        %v932 = vsub.f32 %v922, 1.0
        %v933 = vsub.f32 %v924, 1.0
        %v934 = vsub.f32 %v926, 1.0
        %v935 = vsel %vm903, %v873, %v927
        %v936 = vsel %vm904, %v876, %v928
        %v937 = vsel %vm905, %v881, %v929
        %v938 = vsel %vm906, %v884, %v930
        %v939 = vsel %vm907, %v889, %v931
        %v940 = vsel %vm908, %v892, %v932
        %v941 = vsel %vm909, %v897, %v933
        %v942 = vsel %vm910, %v900, %v934
        %943 = vset.pattern.permute.xlu0 19
        %944 = vperm.xlu0 %943, %v539
        %v945 = vpop.permute.xlu0 %944
        %947 = vset.pattern.permute.xlu0 19
        %948 = vperm.xlu0 %947, %v540
        %v949 = vpop.permute.xlu0 %948
        %951 = vset.pattern.permute.xlu0 19
        %952 = vperm.xlu0 %951, %v541
        %v953 = vpop.permute.xlu0 %952
        %955 = vset.pattern.permute.xlu0 19
        %956 = vperm.xlu0 %955, %v542
        %v957 = vpop.permute.xlu0 %956
        %959 = vset.pattern.permute.xlu0 19
        %960 = vperm.xlu0 %959, %v543
        %v961 = vpop.permute.xlu0 %960
        %963 = vset.pattern.permute.xlu0 19
        %964 = vperm.xlu0 %963, %v544
        %v965 = vpop.permute.xlu0 %964
        %967 = vset.pattern.permute.xlu0 19
        %968 = vperm.xlu0 %967, %v545
        %v969 = vpop.permute.xlu0 %968
        %971 = vset.pattern.permute.xlu0 19
        %972 = vperm.xlu0 %971, %v546
        %v973 = vpop.permute.xlu0 %972
        %v975 = vlaneseq
        %v976 = vshrl.u32 %v975, 7
        %v977 = vsub.s32 1, %v976
        %v978 = vrot.slane %v595, %v977
        %v979 = vadd.f32 %v945, %v978
        %v980 = vadd.f32 %v949, %v978
        %v981 = vadd.f32 %v953, %v978
        %v982 = vadd.f32 %v957, %v978
        %v983 = vadd.f32 %v961, %v978
        %v984 = vadd.f32 %v965, %v978
        %v985 = vadd.f32 %v969, %v978
        %v986 = vadd.f32 %v973, %v978
        %vm987 = vcmp.gt.f32.partialorder %v979, 0.0
        %vm988 = vcmp.gt.f32.partialorder %v980, 0.0
        %vm989 = vcmp.gt.f32.partialorder %v981, 0.0
        %vm990 = vcmp.gt.f32.partialorder %v982, 0.0
        %vm991 = vcmp.gt.f32.partialorder %v983, 0.0
        %vm992 = vcmp.gt.f32.partialorder %v984, 0.0
        %vm993 = vcmp.gt.f32.partialorder %v985, 0.0
        %vm994 = vcmp.gt.f32.partialorder %v986, 0.0
        %v995 = vmul.f32 %v979, 0.2
        %v996 = vmul.f32 %v980, 0.2
        %v997 = vmul.f32 %v981, 0.2
        %v998 = vmul.f32 %v982, 0.2
        %v999 = vmul.f32 %v983, 0.2
        %v1000 = vmul.f32 %v984, 0.2
        %v1001 = vmul.f32 %v985, 0.2
        %v1002 = vmul.f32 %v986, 0.2
        %v1003 = vsel %vm987, %v979, %v995
        %v1004 = vsel %vm988, %v980, %v996
        %v1005 = vsel %vm989, %v981, %v997
        %v1006 = vsel %vm990, %v982, %v998
        %v1007 = vsel %vm991, %v983, %v999
        %v1008 = vsel %vm992, %v984, %v1000
        %v1009 = vsel %vm993, %v985, %v1001
        %v1010 = vsel %vm994, %v986, %v1002
        %v1011 = vsel %vm629, %v1003, -1e+09
        %v1012 = vsel %vm630, %v1004, -1e+09
        %v1013 = vsel %vm631, %v1005, -1e+09
        %v1014 = vsel %vm632, %v1006, -1e+09
        %v1015 = vsel %vm633, %v1007, -1e+09
        %v1016 = vsel %vm634, %v1008, -1e+09
        %v1017 = vsel %vm635, %v1009, -1e+09
        %v1018 = vsel %vm636, %v1010, -1e+09
        %v1019 = vsel %vm719, %v1011, -inf
        %1020 = vmax.xlane.f32.xlu0 %v1019
        %v1021 = vpop.xlane.xlu0 %1020
        %v1022 = vsel %vm719, %v1012, -inf
        %1023 = vmax.xlane.f32.xlu0 %v1022
        %v1024 = vpop.xlane.xlu0 %1023
        %v1025 = vsel %vm719, %v1013, -inf
        %1026 = vmax.xlane.f32.xlu0 %v1025
        %v1027 = vpop.xlane.xlu0 %1026
        %v1028 = vsel %vm719, %v1014, -inf
        %1029 = vmax.xlane.f32.xlu0 %v1028
        %v1030 = vpop.xlane.xlu0 %1029
        %v1031 = vsel %vm719, %v1015, -inf
        %1032 = vmax.xlane.f32.xlu0 %v1031
        %v1033 = vpop.xlane.xlu0 %1032
        %v1034 = vsel %vm719, %v1016, -inf
        %1035 = vmax.xlane.f32.xlu0 %v1034
        %v1036 = vpop.xlane.xlu0 %1035
        %v1037 = vsel %vm719, %v1017, -inf
        %1038 = vmax.xlane.f32.xlu0 %v1037
        %v1039 = vpop.xlane.xlu0 %1038
        %v1040 = vsel %vm719, %v1018, -inf
        %1041 = vmax.xlane.f32.xlu0 %v1040
        %v1042 = vpop.xlane.xlu0 %1041
        %v1043 = vsub.f32 %v1011, %v1021
        %v1044 = vsub.f32 %v1012, %v1024
        %v1045 = vsub.f32 %v1013, %v1027
        %v1046 = vsub.f32 %v1014, %v1030
        %v1047 = vsub.f32 %v1015, %v1033
        %v1048 = vsub.f32 %v1016, %v1036
        %v1049 = vsub.f32 %v1017, %v1039
        %v1050 = vsub.f32 %v1018, %v1042
        %v1051 = vmul.f32 %v1043, 1.442695
        %v1052 = vpow.pop %v1051
        %v1053 = vmul.f32 %v1044, 1.442695
        %v1054 = vpow.pop %v1053
        %v1055 = vmul.f32 %v1045, 1.442695
        %v1056 = vpow.pop %v1055
        %v1057 = vmul.f32 %v1046, 1.442695
        %v1058 = vpow.pop %v1057
        %v1059 = vmul.f32 %v1047, 1.442695
        %v1060 = vpow.pop %v1059
        %v1061 = vmul.f32 %v1048, 1.442695
        %v1062 = vpow.pop %v1061
        %v1063 = vmul.f32 %v1049, 1.442695
        %v1064 = vpow.pop %v1063
        %v1065 = vmul.f32 %v1050, 1.442695
        %v1066 = vpow.pop %v1065
        %v1067 = vsel %vm629, %v1052, 0.0
        %v1068 = vsel %vm630, %v1054, 0.0
        %v1069 = vsel %vm631, %v1056, 0.0
        %v1070 = vsel %vm632, %v1058, 0.0
        %v1071 = vsel %vm633, %v1060, 0.0
        %v1072 = vsel %vm634, %v1062, 0.0
        %v1073 = vsel %vm635, %v1064, 0.0
        %v1074 = vsel %vm636, %v1066, 0.0
        %v1075 = vsel %vm719, %v1067, 0.0
        %1076 = vadd.xlane.f32.xlu0 %v1075
        %v1077 = vpop.xlane.xlu0 %1076
        %v1078 = vsel %vm719, %v1068, 0.0
        %1079 = vadd.xlane.f32.xlu0 %v1078
        %v1080 = vpop.xlane.xlu0 %1079
        %v1081 = vsel %vm719, %v1069, 0.0
        %1082 = vadd.xlane.f32.xlu0 %v1081
        %v1083 = vpop.xlane.xlu0 %1082
        %v1084 = vsel %vm719, %v1070, 0.0
        %1085 = vadd.xlane.f32.xlu0 %v1084
        %v1086 = vpop.xlane.xlu0 %1085
        %v1087 = vsel %vm719, %v1071, 0.0
        %1088 = vadd.xlane.f32.xlu0 %v1087
        %v1089 = vpop.xlane.xlu0 %1088
        %v1090 = vsel %vm719, %v1072, 0.0
        %1091 = vadd.xlane.f32.xlu0 %v1090
        %v1092 = vpop.xlane.xlu0 %1091
        %v1093 = vsel %vm719, %v1073, 0.0
        %1094 = vadd.xlane.f32.xlu0 %v1093
        %v1095 = vpop.xlane.xlu0 %1094
        %v1096 = vsel %vm719, %v1074, 0.0
        %1097 = vadd.xlane.f32.xlu0 %v1096
        %v1098 = vpop.xlane.xlu0 %1097
        %v1099 = vrcp.pop %v1077
        %v1100 = vrcp.pop %v1080
        %v1101 = vrcp.pop %v1083
        %v1102 = vrcp.pop %v1086
        %v1103 = vrcp.pop %v1089
        %v1104 = vrcp.pop %v1092
        %v1105 = vrcp.pop %v1095
        %v1106 = vrcp.pop %v1098
        %v1107 = vmul.f32 %v1067, %v1099
        %v1108 = vmul.f32 %v1068, %v1100
        %v1109 = vmul.f32 %v1069, %v1101
        %v1110 = vmul.f32 %v1070, %v1102
        %v1111 = vmul.f32 %v1071, %v1103
        %v1112 = vmul.f32 %v1072, %v1104
        %v1113 = vmul.f32 %v1073, %v1105
        %v1114 = vmul.f32 %v1074, %v1106
        %v1115 = vpack.c.bf16 %v1108, %v1107
        %v1116 = vpack.c.bf16 %v1110, %v1109
        %v1117 = vpack.c.bf16 %v1112, %v1111
        %v1118 = vpack.c.bf16 %v1114, %v1113
        %1123 = vrot.lane.b32.xlu0 %v639, 120
        %v1124 = vpop.permute.xlu0 %1123
        %1125 = vrot.lane.b32.xlu0 %v640, 120
        %v1126 = vpop.permute.xlu0 %1125
        %1127 = vrot.lane.b32.xlu0 %v641, 120
        %v1128 = vpop.permute.xlu0 %1127
        %1129 = vrot.lane.b32.xlu0 %v642, 120
        %v1130 = vpop.permute.xlu0 %1129
        %1135 = vrot.lane.b32.xlu0 %v824, 120
        %v1136 = vpop.permute.xlu0 %1135
        %v1139 = vsel %vm719, %v1115, 0
        %v1142 = vsel %vm719, %v1116, 0
        %v1145 = vsel %vm719, %v1117, 0
        %v1148 = vsel %vm719, %v1118, 0
        %1150 = vmatprep.subr.bf16.mxu0 0
        %1151 = vmatpush1.bf16.msra.mxu0 %v1124
        %1152 = vmatprep.subr.bf16.mxu0 0
        %1153 = vmatpush1.bf16.msra.mxu0 %v1126
        %1154 = vmatprep.subr.bf16.mxu0 0
        %1155 = vmatpush1.bf16.msra.mxu0 %v1128
        %1156 = vmatprep.subr.bf16.mxu0 0
        %1157 = vmatpush1.bf16.msra.mxu0 %v1130
        %1158 = vmatprep.subr.bf16.mxu0 0
        %1159 = vmatpush1.bf16.msra.mxu0 0
        %1160 = vmatprep.subr.bf16.mxu0 0
        %1161 = vmatpush1.bf16.msra.mxu0 0
        %1162 = vmatprep.subr.bf16.mxu0 0
        %1163 = vmatpush1.bf16.msra.mxu0 0
        %1164 = vmatprep.subr.bf16.mxu0 0
        %1165 = vmatpush1.bf16.msra.mxu0 0
        %1166 = vmatprep.subr.bf16.mxu0 0
        %1167 = vmatpush1.bf16.msra.mxu0 0
        %1168 = vmatprep.subr.bf16.mxu0 0
        %1169 = vmatpush1.bf16.msra.mxu0 0
        %1170 = vmatprep.subr.bf16.mxu0 0
        %1171 = vmatpush1.bf16.msra.mxu0 0
        %1172 = vmatprep.subr.bf16.mxu0 0
        %1173 = vmatpush1.bf16.msra.mxu0 0
        %1174 = vmatprep.subr.bf16.mxu0 0
        %1175 = vmatpush1.bf16.msra.mxu0 0
        %1176 = vmatprep.subr.bf16.mxu0 0
        %1177 = vmatpush1.bf16.msra.mxu0 0
        %1178 = vmatprep.subr.bf16.mxu0 0
        %1179 = vmatpush1.bf16.msra.mxu0 0
        %1180 = vmatprep.subr.bf16.mxu0 0
        %1181 = vmatpush1.bf16.msra.mxu0 0
        %1182 = vmatprep.mubr.bf16.mxu0 0
        %1183 = vmatmul.mubr.bf16.gmra.mrb[0].mxu0 %v1139
        %v1184 = vpop.f32.mrb[0].mxu0
        %v1185 = vadd.f32 %v1136, %v1184
        %v1186 = vpop.f32.mrb[0].mxu0
        %v1187 = vpop.f32.mrb[0].mxu0
        %v1188 = vadd.f32 %v1136, %v1187
        %v1189 = vpop.f32.mrb[0].mxu0
        %1190 = vmatprep.mubr.bf16.mxu0 0
        %1191 = vmatmul.mubr.bf16.gmra.mrb[0].mxu0 %v1142
        %v1192 = vpop.f32.mrb[0].mxu0
        %v1193 = vadd.f32 %v1136, %v1192
        %v1194 = vpop.f32.mrb[0].mxu0
        %v1195 = vpop.f32.mrb[0].mxu0
        %v1196 = vadd.f32 %v1136, %v1195
        %v1197 = vpop.f32.mrb[0].mxu0
        %1198 = vmatprep.mubr.bf16.mxu0 0
        %1199 = vmatmul.mubr.bf16.gmra.mrb[0].mxu0 %v1145
        %v1200 = vpop.f32.mrb[0].mxu0
        %v1201 = vadd.f32 %v1136, %v1200
        %v1202 = vpop.f32.mrb[0].mxu0
        %v1203 = vpop.f32.mrb[0].mxu0
        %v1204 = vadd.f32 %v1136, %v1203
        %v1205 = vpop.f32.mrb[0].mxu0
        %1206 = vmatprep.mubr.bf16.mxu0 0
        %1207 = vmatmul.mubr.bf16.gmra.mrb[0].mxu0 %v1148
        %v1208 = vpop.f32.mrb[0].mxu0
        %v1209 = vadd.f32 %v1136, %v1208
        %v1210 = vpop.f32.mrb[0].mxu0
        %v1211 = vpop.f32.mrb[0].mxu0
        %v1212 = vadd.f32 %v1136, %v1211
        %v1213 = vpop.f32.mrb[0].mxu0
        %1214 = vdwg.mxu0
        %vm1215 = vcmp.gt.f32.partialorder %v1185, 0.0
        %vm1216 = vcmp.gt.f32.partialorder %v1188, 0.0
        %vm1217 = vcmp.gt.f32.partialorder %v1193, 0.0
        %vm1218 = vcmp.gt.f32.partialorder %v1196, 0.0
        %vm1219 = vcmp.gt.f32.partialorder %v1201, 0.0
        %vm1220 = vcmp.gt.f32.partialorder %v1204, 0.0
        %vm1221 = vcmp.gt.f32.partialorder %v1209, 0.0
        %vm1222 = vcmp.gt.f32.partialorder %v1212, 0.0
        %v1223 = vmul.f32 %v1185, 1.442695
        %v1224 = vpow.pop %v1223
        %v1225 = vmul.f32 %v1188, 1.442695
        %v1226 = vpow.pop %v1225
        %v1227 = vmul.f32 %v1193, 1.442695
        %v1228 = vpow.pop %v1227
        %v1229 = vmul.f32 %v1196, 1.442695
        %v1230 = vpow.pop %v1229
        %v1231 = vmul.f32 %v1201, 1.442695
        %v1232 = vpow.pop %v1231
        %v1233 = vmul.f32 %v1204, 1.442695
        %v1234 = vpow.pop %v1233
        %v1235 = vmul.f32 %v1209, 1.442695
        %v1236 = vpow.pop %v1235
        %v1237 = vmul.f32 %v1212, 1.442695
        %v1238 = vpow.pop %v1237
        %v1239 = vsub.f32 %v1224, 1.0
        %v1240 = vsub.f32 %v1226, 1.0
        %v1241 = vsub.f32 %v1228, 1.0
        %v1242 = vsub.f32 %v1230, 1.0
        %v1243 = vsub.f32 %v1232, 1.0
        %v1244 = vsub.f32 %v1234, 1.0
        %v1245 = vsub.f32 %v1236, 1.0
        %v1246 = vsub.f32 %v1238, 1.0
        %v1247 = vsel %vm1215, %v1185, %v1239
        %v1248 = vsel %vm1216, %v1188, %v1240
        %v1249 = vsel %vm1217, %v1193, %v1241
        %v1250 = vsel %vm1218, %v1196, %v1242
        %v1251 = vsel %vm1219, %v1201, %v1243
        %v1252 = vsel %vm1220, %v1204, %v1244
        %v1253 = vsel %vm1221, %v1209, %v1245
        %v1254 = vsel %vm1222, %v1212, %v1246
        %1263 = vrot.lane.b32.xlu0 %v1247, 8
        %v1264 = vpop.permute.xlu0 %1263
        %1265 = vrot.lane.b32.xlu0 %v1248, 8
        %v1266 = vpop.permute.xlu0 %1265
        %1267 = vrot.lane.b32.xlu0 %v1249, 8
        %v1268 = vpop.permute.xlu0 %1267
        %1269 = vrot.lane.b32.xlu0 %v1250, 8
        %v1270 = vpop.permute.xlu0 %1269
        %1271 = vrot.lane.b32.xlu0 %v1251, 8
        %v1272 = vpop.permute.xlu0 %1271
        %1273 = vrot.lane.b32.xlu0 %v1252, 8
        %v1274 = vpop.permute.xlu0 %1273
        %1275 = vrot.lane.b32.xlu0 %v1253, 8
        %v1276 = vpop.permute.xlu0 %1275
        %1277 = vrot.lane.b32.xlu0 %v1254, 8
        %v1278 = vpop.permute.xlu0 %1277
        %vm1287 = vcmask 64512
        %v1288 = vsel %vm1287, %v935, %v1264
        %v1289 = vsel %vm1287, %v936, %v1266
        %v1290 = vsel %vm1287, %v937, %v1268
        %v1291 = vsel %vm1287, %v938, %v1270
        %v1292 = vsel %vm1287, %v939, %v1272
        %v1293 = vsel %vm1287, %v940, %v1274
        %v1294 = vsel %vm1287, %v941, %v1276
        %v1295 = vsel %vm1287, %v942, %v1278
        %v1296 = vpack.c.bf16 %v1289, %v1288
        %v1297 = vpack.c.bf16 %v1291, %v1290
        %v1298 = vpack.c.bf16 %v1293, %v1292
        %v1299 = vpack.c.bf16 %v1295, %v1294
        %s1300 = smul.u32 %s23, 4
        %s1301 = smul.addr %s1300, 8
        %s1302 = scalar_lea.vmem [#allocation3], %s1301
        %vm1303 = vcmask 130048
        %1304 = vst.msk [vmem:[%s1302] sm:$0xff] %vm1303, %v1296
        %1305 = vst.msk [vmem:[%s1302 + $0x8] sm:$0xff] %vm1303, %v1297
        %1306 = vst.msk [vmem:[%s1302 + $0x10] sm:$0xff] %vm1303, %v1298
        %1307 = vst.msk [vmem:[%s1302 + $0x18] sm:$0xff] %vm1303, %v1299
        %p1308 = scmp.eq.s32.totalorder %s23, 1
        // Predicated region
        $region65: #{tpu_custom_call.1} parent=47 // pred_check
          %p1309 = pneg %p1308
        $region66: #{tpu_custom_call.1} parent=47 // pred_check_branch
          %1311 = sbr.rel (%p1309) target = $region68
        $region67: #{tpu_custom_call.1} parent=47 // pred_region
          %v1312 = vld [vmem:[#allocation3] sm:$0xff]
          %v1313 = vld [vmem:[#allocation3 + $0x8] sm:$0xff]
          %v1314 = vld [vmem:[#allocation3 + $0x10] sm:$0xff]
          %v1315 = vld [vmem:[#allocation3 + $0x18] sm:$0xff]
          %v1316 = vld [vmem:[#allocation3 + $0x20] sm:$0xff]
          %v1317 = vld [vmem:[#allocation3 + $0x28] sm:$0xff]
          %v1318 = vld [vmem:[#allocation3 + $0x30] sm:$0xff]
          %v1319 = vld [vmem:[#allocation3 + $0x38] sm:$0xff]
          %v1320 = vld [vmem:[%s4] sm:$0xf]
          %v1321 = vld [vmem:[%s4 + $0x4] sm:$0xf]
          %v1322 = vld [vmem:[%s5] sm:$0x1]
          %v1324 = vlaneseq
          %v1325 = vshrl.u32 %v1324, 7
          %v1326 = vsub.s32 0, %v1325
          %v1327 = vrot.slane %v1322, %v1326
          %v1331 = vunpack.c.l.b16 %v1320
          %v1332 = vunpack.c.l.b16 %v1321
          %v1333 = vpack.c.b16 %v1332, %v1331
          %v1336 = vsel %vm1303, %v1312, 0
          %v1339 = vsel %vm1303, %v1313, 0
          %v1342 = vsel %vm1303, %v1314, 0
          %v1345 = vsel %vm1303, %v1315, 0
          %v1348 = vsel %vm1303, %v1316, 0
          %v1351 = vsel %vm1303, %v1317, 0
          %v1354 = vsel %vm1303, %v1318, 0
          %v1357 = vsel %vm1303, %v1319, 0
          %1359 = vmatprep.subr.bf16.mxu0 0
          %1360 = vmatpush1.bf16.msra.mxu0 %v1333
          %1361 = vmatprep.subr.bf16.mxu0 0
          %1362 = vmatpush1.bf16.msra.mxu0 0
          %1363 = vmatprep.subr.bf16.mxu0 0
          %1364 = vmatpush1.bf16.msra.mxu0 0
          %1365 = vmatprep.subr.bf16.mxu0 0
          %1366 = vmatpush1.bf16.msra.mxu0 0
          %1367 = vmatprep.subr.bf16.mxu0 0
          %1368 = vmatpush1.bf16.msra.mxu0 0
          %1369 = vmatprep.subr.bf16.mxu0 0
          %1370 = vmatpush1.bf16.msra.mxu0 0
          %1371 = vmatprep.subr.bf16.mxu0 0
          %1372 = vmatpush1.bf16.msra.mxu0 0
          %1373 = vmatprep.subr.bf16.mxu0 0
          %1374 = vmatpush1.bf16.msra.mxu0 0
          %1375 = vmatprep.subr.bf16.mxu0 0
          %1376 = vmatpush1.bf16.msra.mxu0 0
          %1377 = vmatprep.subr.bf16.mxu0 0
          %1378 = vmatpush1.bf16.msra.mxu0 0
          %1379 = vmatprep.subr.bf16.mxu0 0
          %1380 = vmatpush1.bf16.msra.mxu0 0
          %1381 = vmatprep.subr.bf16.mxu0 0
          %1382 = vmatpush1.bf16.msra.mxu0 0
          %1383 = vmatprep.subr.bf16.mxu0 0
          %1384 = vmatpush1.bf16.msra.mxu0 0
          %1385 = vmatprep.subr.bf16.mxu0 0
          %1386 = vmatpush1.bf16.msra.mxu0 0
          %1387 = vmatprep.subr.bf16.mxu0 0
          %1388 = vmatpush1.bf16.msra.mxu0 0
          %1389 = vmatprep.subr.bf16.mxu0 0
          %1390 = vmatpush1.bf16.msra.mxu0 0
          %1391 = vmatprep.mubr.bf16.mxu0 0
          %1392 = vmatmul.mubr.bf16.gmra.mrb[0].mxu0 %v1336
          %v1393 = vpop.f32.mrb[0].mxu0
          %v1394 = vadd.f32 %v1327, %v1393
          %v1395 = vpop.f32.mrb[0].mxu0
          %v1396 = vpop.f32.mrb[0].mxu0
          %v1397 = vadd.f32 %v1327, %v1396
          %v1398 = vpop.f32.mrb[0].mxu0
          %1399 = vmatprep.mubr.bf16.mxu0 0
          %1400 = vmatmul.mubr.bf16.gmra.mrb[0].mxu0 %v1339
          %v1401 = vpop.f32.mrb[0].mxu0
          %v1402 = vadd.f32 %v1327, %v1401
          %v1403 = vpop.f32.mrb[0].mxu0
          %v1404 = vpop.f32.mrb[0].mxu0
          %v1405 = vadd.f32 %v1327, %v1404
          %v1406 = vpop.f32.mrb[0].mxu0
          %1407 = vmatprep.mubr.bf16.mxu0 0
          %1408 = vmatmul.mubr.bf16.gmra.mrb[0].mxu0 %v1342
          %v1409 = vpop.f32.mrb[0].mxu0
          %v1410 = vadd.f32 %v1327, %v1409
          %v1411 = vpop.f32.mrb[0].mxu0
          %v1412 = vpop.f32.mrb[0].mxu0
          %v1413 = vadd.f32 %v1327, %v1412
          %v1414 = vpop.f32.mrb[0].mxu0
          %1415 = vmatprep.mubr.bf16.mxu0 0
          %1416 = vmatmul.mubr.bf16.gmra.mrb[0].mxu0 %v1345
          %v1417 = vpop.f32.mrb[0].mxu0
          %v1418 = vadd.f32 %v1327, %v1417
          %v1419 = vpop.f32.mrb[0].mxu0
          %v1420 = vpop.f32.mrb[0].mxu0
          %v1421 = vadd.f32 %v1327, %v1420
          %v1422 = vpop.f32.mrb[0].mxu0
          %1423 = vmatprep.mubr.bf16.mxu0 0
          %1424 = vmatmul.mubr.bf16.gmra.mrb[0].mxu0 %v1348
          %v1425 = vpop.f32.mrb[0].mxu0
          %v1426 = vadd.f32 %v1327, %v1425
          %v1427 = vpop.f32.mrb[0].mxu0
          %v1428 = vpop.f32.mrb[0].mxu0
          %v1429 = vadd.f32 %v1327, %v1428
          %v1430 = vpop.f32.mrb[0].mxu0
          %1431 = vmatprep.mubr.bf16.mxu0 0
          %1432 = vmatmul.mubr.bf16.gmra.mrb[0].mxu0 %v1351
          %v1433 = vpop.f32.mrb[0].mxu0
          %v1434 = vadd.f32 %v1327, %v1433
          %v1435 = vpop.f32.mrb[0].mxu0
          %v1436 = vpop.f32.mrb[0].mxu0
          %v1437 = vadd.f32 %v1327, %v1436
          %v1438 = vpop.f32.mrb[0].mxu0
          %1439 = vmatprep.mubr.bf16.mxu0 0
          %1440 = vmatmul.mubr.bf16.gmra.mrb[0].mxu0 %v1354
          %v1441 = vpop.f32.mrb[0].mxu0
          %v1442 = vadd.f32 %v1327, %v1441
          %v1443 = vpop.f32.mrb[0].mxu0
          %v1444 = vpop.f32.mrb[0].mxu0
          %v1445 = vadd.f32 %v1327, %v1444
          %v1446 = vpop.f32.mrb[0].mxu0
          %1447 = vmatprep.mubr.bf16.mxu0 0
          %1448 = vmatmul.mubr.bf16.gmra.mrb[0].mxu0 %v1357
          %v1449 = vpop.f32.mrb[0].mxu0
          %v1450 = vadd.f32 %v1327, %v1449
          %v1451 = vpop.f32.mrb[0].mxu0
          %v1452 = vpop.f32.mrb[0].mxu0
          %v1453 = vadd.f32 %v1327, %v1452
          %v1454 = vpop.f32.mrb[0].mxu0
          %1455 = vdwg.mxu0
          %v1456 = vtanh.pop %v1394
          %v1457 = vtanh.pop %v1397
          %v1458 = vtanh.pop %v1402
          %v1459 = vtanh.pop %v1405
          %v1460 = vtanh.pop %v1410
          %v1461 = vtanh.pop %v1413
          %v1462 = vtanh.pop %v1418
          %v1463 = vtanh.pop %v1421
          %v1464 = vtanh.pop %v1426
          %v1465 = vtanh.pop %v1429
          %v1466 = vtanh.pop %v1434
          %v1467 = vtanh.pop %v1437
          %v1468 = vtanh.pop %v1442
          %v1469 = vtanh.pop %v1445
          %v1470 = vtanh.pop %v1450
          %v1471 = vtanh.pop %v1453
          %v1472 = vadd.f32 %v1456, %v1457
          %v1473 = vadd.f32 %v1472, %v1458
          %v1474 = vadd.f32 %v1473, %v1459
          %v1475 = vadd.f32 %v1474, %v1460
          %v1476 = vadd.f32 %v1475, %v1461
          %v1477 = vadd.f32 %v1476, %v1462
          %v1478 = vadd.f32 %v1477, %v1463
          %v1479 = vrot.slane %v1478, 4
          %v1480 = vadd.f32 %v1478, %v1479
          %v1481 = vrot.slane %v1480, 2
          %v1482 = vadd.f32 %v1480, %v1481
          %v1483 = vrot.slane %v1482, 1
          %v1484 = vadd.f32 %v1482, %v1483
          %v1485 = vrcp.pop 64.0
          %v1486 = vmul.f32 %v1484, %v1485
          %v1487 = vld [vmem:[%s6] sm:$0x1]
          %v1488 = vmul.f32 %v1486, %v1487
          %vm1489 = vcmask 1040384
          %v1490 = vsel %vm1489, %v1488, 0.0
          %1491 = vadd.xlane.f32.xlu0 %v1490
          %v1492 = vpop.xlane.xlu0 %1491
          %v1493 = vadd.f32 %v1464, %v1465
          %v1494 = vadd.f32 %v1493, %v1466
          %v1495 = vadd.f32 %v1494, %v1467
          %v1496 = vadd.f32 %v1495, %v1468
          %v1497 = vadd.f32 %v1496, %v1469
          %v1498 = vadd.f32 %v1497, %v1470
          %v1499 = vadd.f32 %v1498, %v1471
          %v1500 = vrot.slane %v1499, 4
          %v1501 = vadd.f32 %v1499, %v1500
          %v1502 = vrot.slane %v1501, 2
          %v1503 = vadd.f32 %v1501, %v1502
          %v1504 = vrot.slane %v1503, 1
          %v1505 = vadd.f32 %v1503, %v1504
          %v1506 = vmul.f32 %v1505, %v1485
          %v1507 = vmul.f32 %v1506, %v1487
          %v1508 = vsel %vm1489, %v1507, 0.0
          %1509 = vadd.xlane.f32.xlu0 %v1508
          %v1510 = vpop.xlane.xlu0 %1509
          %vm1511 = vcmask 7168
          %v1512 = vsel %vm1511, %v1492, %v1510
          %vm1513 = vcmask 8192
          %v1514 = vsel %vm1513, %v1512, -inf
          %1515 = vmax.xlane.f32.xlu0 %v1514
          %v1516 = vpop.xlane.xlu0 %1515
          %v1517 = vsub.f32 %v1512, %v1516
          %v1518 = vmul.f32 %v1517, 1.442695
          %v1519 = vpow.pop %v1518
          %v1520 = vsel %vm1513, %v1519, 0.0
          %1521 = vadd.xlane.f32.xlu0 %v1520
          %v1522 = vpop.xlane.xlu0 %1521
          %v1523 = vrcp.pop %v1522
          %v1524 = vmul.f32 %v1519, %v1523
          %v1525 = vunpack.c.l.bf16 %v1312
          %v1526 = vunpack.c.h.bf16 %v1312
          %v1527 = vunpack.c.l.bf16 %v1313
          %v1528 = vunpack.c.h.bf16 %v1313
          %v1529 = vunpack.c.l.bf16 %v1314
          %v1530 = vunpack.c.h.bf16 %v1314
          %v1531 = vunpack.c.l.bf16 %v1315
          %v1532 = vunpack.c.h.bf16 %v1315
          %s1534 = vtos %v1524
          %v1535 = vstv %s1534
          %v1537 = vmul.f32 %v1535, %v1525
          %v1538 = vmul.f32 %v1535, %v1526
          %v1539 = vmul.f32 %v1535, %v1527
          %v1540 = vmul.f32 %v1535, %v1528
          %v1541 = vmul.f32 %v1535, %v1529
          %v1542 = vmul.f32 %v1535, %v1530
          %v1543 = vmul.f32 %v1535, %v1531
          %v1544 = vmul.f32 %v1535, %v1532
          %v1545 = vunpack.c.l.bf16 %v1316
          %v1546 = vunpack.c.h.bf16 %v1316
          %v1547 = vunpack.c.l.bf16 %v1317
          %v1548 = vunpack.c.h.bf16 %v1317
          %v1549 = vunpack.c.l.bf16 %v1318
          %v1550 = vunpack.c.h.bf16 %v1318
          %v1551 = vunpack.c.l.bf16 %v1319
          %v1552 = vunpack.c.h.bf16 %v1319
          %1553 = vrot.lane.b32.xlu0 %v1524, 127
          %v1554 = vpop.permute.xlu0 %1553
          %s1555 = vtos %v1554
          %v1556 = vstv %s1555
          %v1558 = vmul.f32 %v1556, %v1545
          %v1559 = vmul.f32 %v1556, %v1546
          %v1560 = vmul.f32 %v1556, %v1547
          %v1561 = vmul.f32 %v1556, %v1548
          %v1562 = vmul.f32 %v1556, %v1549
          %v1563 = vmul.f32 %v1556, %v1550
          %v1564 = vmul.f32 %v1556, %v1551
          %v1565 = vmul.f32 %v1556, %v1552
          %v1566 = vadd.f32 %v1537, %v1558
          %v1567 = vadd.f32 %v1538, %v1559
          %v1568 = vadd.f32 %v1539, %v1560
          %v1569 = vadd.f32 %v1540, %v1561
          %v1570 = vadd.f32 %v1541, %v1562
          %v1571 = vadd.f32 %v1542, %v1563
          %v1572 = vadd.f32 %v1543, %v1564
          %v1573 = vadd.f32 %v1544, %v1565
          %v1574 = vsel %vm1303, %v1566, 0.0
          %v1575 = vsel %vm1303, %v1567, 0.0
          %v1576 = vsel %vm1303, %v1568, 0.0
          %v1577 = vsel %vm1303, %v1569, 0.0
          %v1578 = vsel %vm1303, %v1570, 0.0
          %v1579 = vsel %vm1303, %v1571, 0.0
          %v1580 = vsel %vm1303, %v1572, 0.0
          %v1581 = vsel %vm1303, %v1573, 0.0
          %v1582 = vpack.c.bf16 %v1575, %v1574
          %v1583 = vpack.c.bf16 %v1577, %v1576
          %v1584 = vpack.c.bf16 %v1579, %v1578
          %v1585 = vpack.c.bf16 %v1581, %v1580
          %v1590 = vunpack.c.l.b16 %v1582
          %v1591 = vunpack.c.h.b16 %v1582
          %v1592 = vunpack.c.l.b16 %v1583
          %v1593 = vunpack.c.h.b16 %v1583
          %v1594 = vunpack.c.l.b16 %v1584
          %v1595 = vunpack.c.h.b16 %v1584
          %v1596 = vunpack.c.l.b16 %v1585
          %v1597 = vunpack.c.h.b16 %v1585
          %v1598 = vpack.c.b16 %v1590, %v1590
          %v1599 = vpack.c.b16 %v1591, %v1591
          %v1600 = vpack.c.b16 %v1592, %v1592
          %v1601 = vpack.c.b16 %v1593, %v1593
          %v1602 = vpack.c.b16 %v1594, %v1594
          %v1603 = vpack.c.b16 %v1595, %v1595
          %v1604 = vpack.c.b16 %v1596, %v1596
          %v1605 = vpack.c.b16 %v1597, %v1597
          %1614 = vst [vmem:[#allocation10] sm:$0xf] %v1598
          %1615 = vst [vmem:[#allocation10 + $0x4] sm:$0xf] %v1599
          %1616 = vst [vmem:[#allocation10 + $0x8] sm:$0xf] %v1600
          %1617 = vst [vmem:[#allocation10 + $0xc] sm:$0xf] %v1601
          %1618 = vst [vmem:[#allocation10 + $0x10] sm:$0xf] %v1602
          %1619 = vst [vmem:[#allocation10 + $0x14] sm:$0xf] %v1603
          %1620 = vst [vmem:[#allocation10 + $0x18] sm:$0xf] %v1604
          %1621 = vst [vmem:[#allocation10 + $0x1c] sm:$0xf] %v1605
        $region68: #{tpu_custom_call.1} parent=47 // pred_fallthru
          _
        // Predicated region
        $region69: #{tpu_custom_call.1} parent=47 // pred_check
          %p1622 = pneg %p188
        $region70: #{tpu_custom_call.1} parent=47 // pred_check_branch
          %1624 = sbr.rel (%p1622) target = $region72
        $region71: #{tpu_custom_call.1} parent=47 // pred_region
          %s1626 = ssub.s32 512, 512
          %1627 = vsyncadd [#allocation6], %s1626
          %s1628 = sshll.u32 [#allocation10], 4
          %s1629 = int_to_ptr.vmem [resolvable:$true] %s1628
          %1634 = dma.vmem_to_hbm [thread:$0]  %s1629, 512, %s7, [#allocation6], 64, 64, 4
        $region72: #{tpu_custom_call.1} parent=47 // pred_fallthru
          _
        // Predicated region
        $region73: #{tpu_custom_call.1} parent=47 // pred_check
          %p1635 = pneg %p188
        $region74: #{tpu_custom_call.1} parent=47 // pred_check_branch
          %1637 = sbr.rel (%p1635) target = $region76
        $region75: #{tpu_custom_call.1} parent=47 // pred_region
          %1638 = dma.done [#allocation6], 512
        $region76: #{tpu_custom_call.1} parent=47 // pred_fallthru
          _
      $region48: #{tpu_custom_call.1} parent=5 // pred_fallthru
        _
      %p1639 = scmp.le.s32.totalorder 2, %s18
      // Predicated region
      $region77: #{tpu_custom_call.1} parent=5 // pred_check
        %p1640 = pneg %p1639
      $region78: #{tpu_custom_call.1} parent=5 // pred_check_branch
        %1642 = sbr.rel (%p1640) target = $region80
      $region79: #{tpu_custom_call.1} parent=5 // pred_region
        %s1643 = ssub.s32 %s18, 2
      $region80: #{tpu_custom_call.1} parent=5 // pred_fallthru
        _
    $region6: #{tpu_custom_call.1} parent=1 // loop_footer
      %s22 = sadd.s32 1, %s18
    $region7: #{tpu_custom_call.1} parent=1 // loop_footer_branch
      %17 = sbr.rel target = $region3
    $region8: #{tpu_custom_call.1} parent=1 // loop_exit
      _
    %1644 = vsyncpa [#allocation5], 1
    %s1645 = scalar_lea.sflag [#allocation5], 1
    %1646 = vsyncpa %s1645, 1
    %1647 = vsyncpa [#allocation8], 1
    %1648 = vsyncpa [#allocation6], 1
    %s1649 = scalar_lea.sflag [#allocation6], 1
    %1650 = vsyncpa %s1649, 1

</llo_original>
